<compile_context>
chip_gen: v7x
topology: tpu7x:2x2x1
jax: 0.10.0
libtpu: 0.0.40
codegen_flags: <defaults>
</compile_context>

<pallas_src>
import math
import functools
import numpy as np

import jax
import jax.numpy as jnp
from jax import lax
from jax.experimental import pallas as pl
from jax.experimental.pallas import tpu as pltpu

NEG_INF = -1e9   # masked-key fill value (matches neginf-style masked_fill)
LN_EPS = 1e-5    # nn.LayerNorm default eps


def _layer_norm_2d(x2, gamma, beta):
    """LayerNorm over the last dim of a (N, D) tile. gamma/beta: (1, D)."""
    mu = jnp.mean(x2, axis=-1, keepdims=True)
    xc = x2 - mu
    var = jnp.mean(xc * xc, axis=-1, keepdims=True)
    inv = lax.rsqrt(var + LN_EPS)           # EUP rsqrt
    return xc * inv * gamma + beta


def encoder_layer_kernel(
    t0_ref,      # (1, S, D)   prepped input: (x + pos_emb) * mask      f32
    mask_ref,    # (1, S, 1)   token mask                               f32
    abias_ref,   # (1, 1, S)   additive key-mask bias (0 or NEG_INF)    f32
    wqkv_ref,    # (1, D, 3D)  fused q|k|v projection (q pre-scaled)    bf16
    bqkv_ref,    # (1, 1, 3D)  fused bias (q part pre-scaled)           f32
    wo_ref,      # (1, D, D)   attention output projection              bf16
    bo_ref,      # (1, 1, D)                                            f32
    ln1g_ref,    # (1, 1, D)
    ln1b_ref,    # (1, 1, D)
    w1_ref,      # (1, D, H)   FFN lin1                                 bf16
    b1_ref,      # (1, 1, H)
    w2_ref,      # (1, H, D)   FFN lin2                                 bf16
    b2_ref,      # (1, 1, D)
    ln2g_ref,    # (1, 1, D)
    ln2b_ref,    # (1, 1, D)
    out_ref,     # (1, 1, D)   masked mean over the sequence
    t_ref,       # (S, D) f32  VMEM scratch: activation carried across layers
    *, n_heads,
):
    S, D = t_ref.shape
    dh = D // n_heads
    bf16 = jnp.bfloat16

    l = pl.program_id(1)
    last = pl.num_programs(1) - 1

    # ---- layer 0: load the prepped (embedded + masked) input -----------------
    @pl.when(l == 0)
    def _():
        t_ref[...] = t0_ref[0]

    t2 = t_ref[...]                       # (S, D) f32 residual stream
    mask2 = mask_ref[0]                   # (S, 1)
    kbias = abias_ref[0]                  # (1, S)

    # ---- multi-head self-attention -------------------------------------------
    # fused Q/K/V projection: one MXU push (bf16 operands, f32 accumulate)
    qkv = jnp.dot(t2.astype(bf16), wqkv_ref[0],
                  preferred_element_type=jnp.float32) + bqkv_ref[0]   # (S, 3D)

    def split_heads(start):
        # (S, n_heads*dh) columns -> (n_heads, S, dh) head-batched stack
        return jnp.concatenate(
            [qkv[:, start + h * dh: start + (h + 1) * dh].reshape(1, S, dh)
             for h in range(n_heads)], axis=0)

    q = split_heads(0).astype(bf16)       # 1/sqrt(dh) already folded into wqkv
    k = split_heads(D).astype(bf16)
    v = split_heads(2 * D).astype(bf16)

    # one batched score contraction for all heads (contract last dims: no k.T)
    scores = jnp.einsum('hqd,hkd->hqk', q, k,
                        preferred_element_type=jnp.float32)           # (H, S, S)
    scores = scores + kbias[None]                                     # mask keys
    m = jnp.max(scores, axis=-1, keepdims=True)
    e = jnp.exp(scores - m)
    denom = jnp.sum(e, axis=-1, keepdims=True)
    attn = e * pl.reciprocal(denom, approx=True)                      # EUP slot
    ctx = jnp.einsum('hqk,hkd->hqd', attn.astype(bf16), v,
                     preferred_element_type=jnp.float32)              # (H, S, dh)
    ctx2 = jnp.concatenate([ctx[h] for h in range(n_heads)], axis=-1)  # (S, D)
    attn_out = jnp.dot(ctx2.astype(bf16), wo_ref[0],
                       preferred_element_type=jnp.float32) + bo_ref[0]

    # residual + LayerNorm1
    t2 = _layer_norm_2d(t2 + attn_out, ln1g_ref[0], ln1b_ref[0])

    # ---- FFN: Linear -> ReLU -> Linear ----------------------------------------
    h1 = jnp.dot(t2.astype(bf16), w1_ref[0],
                 preferred_element_type=jnp.float32) + b1_ref[0]
    h1 = jnp.maximum(h1, 0.0)
    ffn_out = jnp.dot(h1.astype(bf16), w2_ref[0],
                      preferred_element_type=jnp.float32) + b2_ref[0]

    # residual + LayerNorm2, then re-apply the token mask
    t2 = _layer_norm_2d(t2 + ffn_out, ln2g_ref[0], ln2b_ref[0]) * mask2
    t_ref[...] = t2

    # ---- last layer: reduction=True masked mean over the sequence -------------
    @pl.when(l == last)
    def _():
        den = jnp.maximum(jnp.sum(mask2, axis=0, keepdims=True), 1e-7)   # (1, 1)
        pooled = jnp.sum(t2, axis=0, keepdims=True) / den                # (1, D)
        out_ref[...] = pooled[None].astype(out_ref.dtype)                # (1,1,D)


def transformer_encoder_4kg(x, mask, params, *, n_heads, n_layers):
    """x: (B, S, D) float32; mask: (B, S) int (1 inside sequence, 0 = pad)."""
    B, S, D = x.shape
    H = params["w1"].shape[-1]
    L = n_layers
    dh = D // n_heads

    # positions = clamp(cumsum(mask) - 1, 0) and the positional-embedding row
    # gather are data-dependent gathers with no rectangular BlockSpec form;
    # fold the gather + add + initial masking into one prepped tensor so the
    # kernel streams a single (B, S, D) activation input.
    # TODO(synk): fold the row gather into the kernel via a DMA gather if the
    # table / sequence ever become large enough to matter.
    positions = jnp.maximum(jnp.cumsum(mask.astype(jnp.int32), axis=1) - 1, 0)
    mask_f = mask.astype(jnp.float32)
    mask_tok = mask_f[:, :, None]                                        # (B, S, 1)
    t0 = (x.astype(jnp.float32)
          + jnp.take(params["pe"], positions, axis=0)) * mask_tok        # (B, S, D)
    attn_bias = jnp.where(mask_f[:, None, :] == 0.0, NEG_INF, 0.0
                          ).astype(jnp.float32)                          # (B, 1, S)

    # Fold the 1/sqrt(dh) query scaling into the q slice of the fused
    # projection (exact), then cast matmul weights to bf16 for MXU-rate.
    inv_scale = 1.0 / math.sqrt(dh)
    col_scale = jnp.concatenate(
        [jnp.full((D,), inv_scale, jnp.float32),
         jnp.ones((2 * D,), jnp.float32)])
    wqkv = (params["wqkv"] * col_scale[None, None, :]).astype(jnp.bfloat16)
    bqkv = (params["bqkv"] * col_scale[None, None, :]).astype(jnp.float32)
    wo = params["wo"].astype(jnp.bfloat16)
    w1 = params["w1"].astype(jnp.bfloat16)
    w2 = params["w2"].astype(jnp.bfloat16)

    kernel = functools.partial(encoder_layer_kernel, n_heads=n_heads)

    def bspec(shape, which):
        if which == "batch":      # indexed by the batch grid axis
            return pl.BlockSpec(shape, lambda b, l: (b,) + (0,) * (len(shape) - 1))
        else:                     # "layer": streamed one layer per grid step
            return pl.BlockSpec(shape, lambda b, l: (l,) + (0,) * (len(shape) - 1))

    out = pl.pallas_call(
        kernel,
        out_shape=jax.ShapeDtypeStruct((B, 1, D), jnp.float32),
        grid=(B, L),
        in_specs=[
            bspec((1, S, D), "batch"),        # t0 (prepped input)
            bspec((1, S, 1), "batch"),        # token mask
            bspec((1, 1, S), "batch"),        # additive key-mask bias
            bspec((1, D, 3 * D), "layer"),    # wqkv (bf16)
            bspec((1, 1, 3 * D), "layer"),    # bqkv
            bspec((1, D, D), "layer"),        # wo (bf16)
            bspec((1, 1, D), "layer"),        # bo
            bspec((1, 1, D), "layer"),        # ln1 gamma
            bspec((1, 1, D), "layer"),        # ln1 beta
            bspec((1, D, H), "layer"),        # w1 (bf16)
            bspec((1, 1, H), "layer"),        # b1
            bspec((1, H, D), "layer"),        # w2 (bf16)
            bspec((1, 1, D), "layer"),        # b2
            bspec((1, 1, D), "layer"),        # ln2 gamma
            bspec((1, 1, D), "layer"),        # ln2 beta
        ],
        out_specs=pl.BlockSpec((1, 1, D), lambda b, l: (b, 0, 0)),
        scratch_shapes=[pltpu.VMEM((S, D), jnp.float32)],   # residual stream
        compiler_params=pltpu.CompilerParams(
            dimension_semantics=("parallel", "arbitrary"),
            vmem_limit_bytes=32 * 1024 * 1024,
        ),
    )(
        t0, mask_tok, attn_bias,
        wqkv, bqkv, wo, params["bo"],
        params["ln1_g"], params["ln1_b"],
        w1, params["b1"], w2, params["b2"],
        params["ln2_g"], params["ln2_b"],
    )
    return out[:, 0, :].astype(x.dtype)


# ----------------------------- pure-JAX reference ----------------------------

def reference_forward(x, mask, params, *, n_heads, n_layers):
    B, S, D = x.shape
    dh = D // n_heads
    scale = math.sqrt(dh)
    mask_f = mask.astype(x.dtype)

    positions = jnp.maximum(jnp.cumsum(mask.astype(jnp.int32), axis=1) - 1, 0)
    t = x + params["pe"][positions]
    t = t * mask_f[:, :, None]

    def layer_norm(v, g, b):
        mu = v.mean(axis=-1, keepdims=True)
        var = ((v - mu) ** 2).mean(axis=-1, keepdims=True)
        return (v - mu) / jnp.sqrt(var + LN_EPS) * g + b

    for l in range(n_layers):
        wqkv = params["wqkv"][l]
        bqkv = params["bqkv"][l][0]
        wq, wk, wv = wqkv[:, :D], wqkv[:, D:2 * D], wqkv[:, 2 * D:]
        bq, bk, bv = bqkv[:D], bqkv[D:2 * D], bqkv[2 * D:]

        q = t @ wq + bq
        k = t @ wk + bk
        v = t @ wv + bv

        def split_heads(z):
            return z.reshape(B, S, n_heads, dh).transpose(0, 2, 1, 3)

        qh = split_heads(q) / scale
        kh = split_heads(k)
        vh = split_heads(v)

        scores = jnp.einsum('bhqd,bhkd->bhqk', qh, kh)
        scores = scores + jnp.where(mask_f[:, None, None, :] == 0, NEG_INF, 0.0)
        attn = jax.nn.softmax(scores, axis=-1)
        ctx = jnp.einsum('bhqk,bhkd->bhqd', attn, vh)
        ctx = ctx.transpose(0, 2, 1, 3).reshape(B, S, D)

        attn_out = ctx @ params["wo"][l] + params["bo"][l][0]
        t = layer_norm(t + attn_out, params["ln1_g"][l][0], params["ln1_b"][l][0])

        h1 = jnp.maximum(t @ params["w1"][l] + params["b1"][l][0], 0.0)
        ffn_out = h1 @ params["w2"][l] + params["b2"][l][0]
        t = layer_norm(t + ffn_out, params["ln2_g"][l][0], params["ln2_b"][l][0])
        t = t * mask_f[:, :, None]

    denom = jnp.maximum(mask_f.sum(axis=1, keepdims=True), 1e-7)
    return t.sum(axis=1) / denom


# ------------------------------- parameter init -------------------------------

def sinusoidal_table(n_positions, dim):
    """Matches create_position_codes: sin at even columns, cos at odd."""
    pe = np.zeros((n_positions, dim), dtype=np.float32)
    position_enc = np.array(
        [[pos / np.power(10000, 2 * j / dim) for j in range(dim // 2)]
         for pos in range(n_positions)], dtype=np.float32)
    pe[:, 0::2] = np.sin(position_enc)
    pe[:, 1::2] = np.cos(position_enc)
    return jnp.asarray(pe)


def init_params(key, *, n_layers, d_model, ffn_size, n_positions):
    L, D, H = n_layers, d_model, ffn_size
    ks = jax.random.split(key, 12)
    s = 0.08
    return {
        "wqkv": s * jax.random.normal(ks[0], (L, D, 3 * D), jnp.float32),
        "bqkv": s * jax.random.normal(ks[1], (L, 1, 3 * D), jnp.float32),
        "wo":   s * jax.random.normal(ks[2], (L, D, D), jnp.float32),
        "bo":   s * jax.random.normal(ks[3], (L, 1, D), jnp.float32),
        "ln1_g": 1.0 + 0.05 * jax.random.normal(ks[4], (L, 1, D), jnp.float32),
        "ln1_b": 0.05 * jax.random.normal(ks[5], (L, 1, D), jnp.float32),
        "w1":   s * jax.random.normal(ks[6], (L, D, H), jnp.float32),
        "b1":   s * jax.random.normal(ks[7], (L, 1, H), jnp.float32),
        "w2":   s * jax.random.normal(ks[8], (L, H, D), jnp.float32),
        "b2":   s * jax.random.normal(ks[9], (L, 1, D), jnp.float32),
        "ln2_g": 1.0 + 0.05 * jax.random.normal(ks[10], (L, 1, D), jnp.float32),
        "ln2_b": 0.05 * jax.random.normal(ks[11], (L, 1, D), jnp.float32),
        "pe": sinusoidal_table(n_positions, D),
    }


if __name__ == "__main__":
    # Small shapes consistent with the module:
    # batch=2, seq=8, embedding_size=32, ffn_size=64, n_heads=2, n_layers=2.
    B, S, D, H = 2, 8, 32, 64
    N_HEADS, N_LAYERS, N_POSITIONS = 2, 2, 16

    key = jax.random.PRNGKey(0)
    k_x, k_p = jax.random.split(key)
    x = jax.random.normal(k_x, (B, S, D), jnp.float32)
    # mask: batch 0 fully valid, batch 1 padded after 5 tokens
    mask = jnp.array([[1] * S, [1] * 5 + [0] * (S - 5)], dtype=jnp.int32)

    params = init_params(k_p, n_layers=N_LAYERS, d_model=D,
                         ffn_size=H, n_positions=N_POSITIONS)

    out = transformer_encoder_4kg(x, mask, params,
                                  n_heads=N_HEADS, n_layers=N_LAYERS)
    out = jax.block_until_ready(out)

    ref = reference_forward(x, mask, params,
                            n_heads=N_HEADS, n_layers=N_LAYERS)
    assert out.shape == (B, D), f"bad output shape {out.shape}"
    # bf16 MXU operands + approx softmax reciprocal -> tolerance loosened
    # from the pure-f32 5e-4 (per the perf review's correctness note).
    assert jnp.allclose(out, ref, atol=2e-2, rtol=2e-2), (
        f"mismatch vs reference, max abs diff = {jnp.max(jnp.abs(out - ref))}")

    print("KERNEL_OK")
</pallas_src>

<mosaic_0001>
module attributes {stable_mosaic.version = 11 : i64} {
  func.func @encoder_layer_kernel(%arg0: i32, %arg1: i32, %arg2: memref<1x8x32xf32, #tpu.memory_space<vmem>>, %arg3: memref<1x8x1xf32, #tpu.memory_space<vmem>>, %arg4: memref<1x1x8xf32, #tpu.memory_space<vmem>>, %arg5: memref<1x32x96xbf16, #tpu.memory_space<vmem>>, %arg6: memref<1x1x96xf32, #tpu.memory_space<vmem>>, %arg7: memref<1x32x32xbf16, #tpu.memory_space<vmem>>, %arg8: memref<1x1x32xf32, #tpu.memory_space<vmem>>, %arg9: memref<1x1x32xf32, #tpu.memory_space<vmem>>, %arg10: memref<1x1x32xf32, #tpu.memory_space<vmem>>, %arg11: memref<1x32x64xbf16, #tpu.memory_space<vmem>>, %arg12: memref<1x1x64xf32, #tpu.memory_space<vmem>>, %arg13: memref<1x64x32xbf16, #tpu.memory_space<vmem>>, %arg14: memref<1x1x32xf32, #tpu.memory_space<vmem>>, %arg15: memref<1x1x32xf32, #tpu.memory_space<vmem>>, %arg16: memref<1x1x32xf32, #tpu.memory_space<vmem>>, %arg17: memref<1x1x32xf32, #tpu.memory_space<vmem>>, %arg18: memref<8x32xf32, #tpu.memory_space<vmem>>) attributes {dimension_semantics = [#tpu.dimension_semantics<parallel>, #tpu.dimension_semantics<arbitrary>], iteration_bounds = array<i64: 2, 2>, scalar_prefetch = 0 : i64, scratch_operands = 1 : i64, tpu.core_type = #tpu.core_type<tc>, window_params = [{transform_indices = @transform_0, window_bounds = array<i64: 1, 8, 32>}, {transform_indices = @transform_1, window_bounds = array<i64: 1, 8, 1>}, {transform_indices = @transform_2, window_bounds = array<i64: 1, 1, 8>}, {transform_indices = @transform_3, window_bounds = array<i64: 1, 32, 96>}, {transform_indices = @transform_4, window_bounds = array<i64: 1, 1, 96>}, {transform_indices = @transform_5, window_bounds = array<i64: 1, 32, 32>}, {transform_indices = @transform_6, window_bounds = array<i64: 1, 1, 32>}, {transform_indices = @transform_7, window_bounds = array<i64: 1, 1, 32>}, {transform_indices = @transform_8, window_bounds = array<i64: 1, 1, 32>}, {transform_indices = @transform_9, window_bounds = array<i64: 1, 32, 64>}, {transform_indices = @transform_10, window_bounds = array<i64: 1, 1, 64>}, {transform_indices = @transform_11, window_bounds = array<i64: 1, 64, 32>}, {transform_indices = @transform_12, window_bounds = array<i64: 1, 1, 32>}, {transform_indices = @transform_13, window_bounds = array<i64: 1, 1, 32>}, {transform_indices = @transform_14, window_bounds = array<i64: 1, 1, 32>}, {transform_indices = @transform_15, window_bounds = array<i64: 1, 1, 32>}]} {
    %c0_i32 = arith.constant 0 : i32
    %0 = arith.cmpi eq, %arg1, %c0_i32 : i32
    %1 = arith.extui %0 : i1 to i32
    %c0_i32_0 = arith.constant 0 : i32
    %2 = arith.cmpi ne, %1, %c0_i32_0 : i32
    scf.if %2 {
      %c0_65 = arith.constant 0 : index
      %c0_66 = arith.constant 0 : index
      %c0_67 = arith.constant 0 : index
      %137 = vector.load %arg2[%c0_65, %c0_66, %c0_67] : memref<1x8x32xf32, #tpu.memory_space<vmem>>, vector<1x8x32xf32>
      %138 = vector.shape_cast %137 : vector<1x8x32xf32> to vector<8x32xf32>
      %c0_68 = arith.constant 0 : index
      %c0_69 = arith.constant 0 : index
      %139 = vector.load %arg18[%c0_68, %c0_69] : memref<8x32xf32, #tpu.memory_space<vmem>>, vector<8x32xf32>
      tpu.vector_store %arg18[%c0_68, %c0_69], %138 {strides = array<i32>} : memref<8x32xf32, #tpu.memory_space<vmem>>, vector<8x32xf32>,
    } else {
    }
    %c0 = arith.constant 0 : index
    %c0_1 = arith.constant 0 : index
    %3 = vector.load %arg18[%c0, %c0_1] : memref<8x32xf32, #tpu.memory_space<vmem>>, vector<8x32xf32>
    %c0_2 = arith.constant 0 : index
    %c0_3 = arith.constant 0 : index
    %c0_4 = arith.constant 0 : index
    %4 = vector.load %arg3[%c0_2, %c0_3, %c0_4] : memref<1x8x1xf32, #tpu.memory_space<vmem>>, vector<1x8x1xf32>
    %5 = vector.shape_cast %4 : vector<1x8x1xf32> to vector<8x1xf32>
    %c0_5 = arith.constant 0 : index
    %c0_6 = arith.constant 0 : index
    %c0_7 = arith.constant 0 : index
    %6 = vector.load %arg4[%c0_5, %c0_6, %c0_7] : memref<1x1x8xf32, #tpu.memory_space<vmem>>, vector<1x1x8xf32>
    %7 = vector.shape_cast %6 : vector<1x1x8xf32> to vector<1x8xf32>
    %8 = arith.truncf %3 : vector<8x32xf32> to vector<8x32xbf16>
    %c0_8 = arith.constant 0 : index
    %c0_9 = arith.constant 0 : index
    %c0_10 = arith.constant 0 : index
    %9 = vector.load %arg5[%c0_8, %c0_9, %c0_10] : memref<1x32x96xbf16, #tpu.memory_space<vmem>>, vector<1x32x96xbf16>
    %10 = vector.shape_cast %9 : vector<1x32x96xbf16> to vector<32x96xbf16>
    %cst = arith.constant dense<0.000000e+00> : vector<8x96xf32>
    %11 = tpu.matmul %8, %10, %cst {dimension_numbers = #tpu.dot_dimension_numbers<[1], [0], [0], [1], [0, 0, 1, 1], [], []>} : vector<8x32xbf16>, vector<32x96xbf16>, vector<8x96xf32> -> vector<8x96xf32>
    %c0_11 = arith.constant 0 : index
    %c0_12 = arith.constant 0 : index
    %c0_13 = arith.constant 0 : index
    %12 = vector.load %arg6[%c0_11, %c0_12, %c0_13] : memref<1x1x96xf32, #tpu.memory_space<vmem>>, vector<1x1x96xf32>
    %13 = vector.shape_cast %12 : vector<1x1x96xf32> to vector<1x96xf32>
    %14 = vector.broadcast %13 : vector<1x96xf32> to vector<8x96xf32>
    %15 = arith.addf %11, %14 : vector<8x96xf32>
    %16 = vector.extract_strided_slice %15 {offsets = [0, 0], sizes = [8, 16], strides = [1, 1]} : vector<8x96xf32> to vector<8x16xf32>
    %17 = vector.shape_cast %16 : vector<8x16xf32> to vector<1x8x16xf32>
    %18 = vector.extract_strided_slice %15 {offsets = [0, 16], sizes = [8, 16], strides = [1, 1]} : vector<8x96xf32> to vector<8x16xf32>
    %19 = vector.shape_cast %18 : vector<8x16xf32> to vector<1x8x16xf32>
    %20 = tpu.concatenate %17, %19 in 0 : vector<1x8x16xf32>, vector<1x8x16xf32> -> vector<2x8x16xf32>
    %21 = arith.truncf %20 : vector<2x8x16xf32> to vector<2x8x16xbf16>
    %22 = vector.extract_strided_slice %15 {offsets = [0, 32], sizes = [8, 16], strides = [1, 1]} : vector<8x96xf32> to vector<8x16xf32>
    %23 = vector.shape_cast %22 : vector<8x16xf32> to vector<1x8x16xf32>
    %24 = vector.extract_strided_slice %15 {offsets = [0, 48], sizes = [8, 16], strides = [1, 1]} : vector<8x96xf32> to vector<8x16xf32>
    %25 = vector.shape_cast %24 : vector<8x16xf32> to vector<1x8x16xf32>
    %26 = tpu.concatenate %23, %25 in 0 : vector<1x8x16xf32>, vector<1x8x16xf32> -> vector<2x8x16xf32>
    %27 = arith.truncf %26 : vector<2x8x16xf32> to vector<2x8x16xbf16>
    %28 = vector.extract_strided_slice %15 {offsets = [0, 64], sizes = [8, 16], strides = [1, 1]} : vector<8x96xf32> to vector<8x16xf32>
    %29 = vector.shape_cast %28 : vector<8x16xf32> to vector<1x8x16xf32>
    %30 = vector.extract_strided_slice %15 {offsets = [0, 80], sizes = [8, 16], strides = [1, 1]} : vector<8x96xf32> to vector<8x16xf32>
    %31 = vector.shape_cast %30 : vector<8x16xf32> to vector<1x8x16xf32>
    %32 = tpu.concatenate %29, %31 in 0 : vector<1x8x16xf32>, vector<1x8x16xf32> -> vector<2x8x16xf32>
    %33 = arith.truncf %32 : vector<2x8x16xf32> to vector<2x8x16xbf16>
    "tpu.trace_start"() <{level = 10 : i32, message = "hqd,hkd->hqk"}> : () -> ()
    %cst_14 = arith.constant dense<0.000000e+00> : vector<2x8x8xf32>
    %34 = tpu.matmul %21, %27, %cst_14 {dimension_numbers = #tpu.dot_dimension_numbers<[2], [2], [1], [1], [0, 0, 0, 1, 1, 1], [0], [0]>} : vector<2x8x16xbf16>, vector<2x8x16xbf16>, vector<2x8x8xf32> -> vector<2x8x8xf32>
    "tpu.trace_stop"() : () -> ()
    %35 = vector.shape_cast %7 : vector<1x8xf32> to vector<1x1x8xf32>
    %36 = vector.broadcast %35 : vector<1x1x8xf32> to vector<2x8x8xf32>
    %37 = arith.addf %34, %36 : vector<2x8x8xf32>
    %cst_15 = arith.constant dense<0xFF800000> : vector<2x8xf32>
    %38 = vector.multi_reduction <maximumf>, %37, %cst_15 [2] : vector<2x8x8xf32> to vector<2x8xf32>
    %39 = vector.shape_cast %38 : vector<2x8xf32> to vector<2x8x1xf32>
    %40 = vector.broadcast %39 : vector<2x8x1xf32> to vector<2x8x8xf32>
    %41 = arith.subf %37, %40 : vector<2x8x8xf32>
    %42 = math.exp %41 : vector<2x8x8xf32>
    %cst_16 = arith.constant dense<0.000000e+00> : vector<2x8xf32>
    %43 = vector.multi_reduction <add>, %42, %cst_16 [2] : vector<2x8x8xf32> to vector<2x8xf32>
    %44 = vector.shape_cast %43 : vector<2x8xf32> to vector<2x8x1xf32>
    %45 = tpu.reciprocal %44 {approx = true} : vector<2x8x1xf32> -> vector<2x8x1xf32>
    %46 = vector.broadcast %45 : vector<2x8x1xf32> to vector<2x8x8xf32>
    %47 = arith.mulf %42, %46 : vector<2x8x8xf32>
    %48 = arith.truncf %47 : vector<2x8x8xf32> to vector<2x8x8xbf16>
    "tpu.trace_start"() <{level = 10 : i32, message = "hqk,hkd->hqd"}> : () -> ()
    %cst_17 = arith.constant dense<0.000000e+00> : vector<2x8x16xf32>
    %49 = tpu.matmul %48, %33, %cst_17 {dimension_numbers = #tpu.dot_dimension_numbers<[2], [1], [1], [2], [0, 0, 0, 1, 1, 2], [0], [0]>} : vector<2x8x8xbf16>, vector<2x8x16xbf16>, vector<2x8x16xf32> -> vector<2x8x16xf32>
    "tpu.trace_stop"() : () -> ()
    %50 = vector.extract_strided_slice %49 {offsets = [0, 0, 0], sizes = [1, 8, 16], strides = [1, 1, 1]} : vector<2x8x16xf32> to vector<1x8x16xf32>
    %51 = vector.shape_cast %50 : vector<1x8x16xf32> to vector<8x16xf32>
    %52 = vector.extract_strided_slice %49 {offsets = [1, 0, 0], sizes = [1, 8, 16], strides = [1, 1, 1]} : vector<2x8x16xf32> to vector<1x8x16xf32>
    %53 = vector.shape_cast %52 : vector<1x8x16xf32> to vector<8x16xf32>
    %54 = tpu.concatenate %51, %53 in 1 : vector<8x16xf32>, vector<8x16xf32> -> vector<8x32xf32>
    %55 = arith.truncf %54 : vector<8x32xf32> to vector<8x32xbf16>
    %c0_18 = arith.constant 0 : index
    %c0_19 = arith.constant 0 : index
    %c0_20 = arith.constant 0 : index
    %56 = vector.load %arg7[%c0_18, %c0_19, %c0_20] : memref<1x32x32xbf16, #tpu.memory_space<vmem>>, vector<1x32x32xbf16>
    %57 = vector.shape_cast %56 : vector<1x32x32xbf16> to vector<32x32xbf16>
    %cst_21 = arith.constant dense<0.000000e+00> : vector<8x32xf32>
    %58 = tpu.matmul %55, %57, %cst_21 {dimension_numbers = #tpu.dot_dimension_numbers<[1], [0], [0], [1], [0, 0, 1, 1], [], []>} : vector<8x32xbf16>, vector<32x32xbf16>, vector<8x32xf32> -> vector<8x32xf32>
    %c0_22 = arith.constant 0 : index
    %c0_23 = arith.constant 0 : index
    %c0_24 = arith.constant 0 : index
    %59 = vector.load %arg8[%c0_22, %c0_23, %c0_24] : memref<1x1x32xf32, #tpu.memory_space<vmem>>, vector<1x1x32xf32>
    %60 = vector.shape_cast %59 : vector<1x1x32xf32> to vector<1x32xf32>
    %61 = vector.broadcast %60 : vector<1x32xf32> to vector<8x32xf32>
    %62 = arith.addf %58, %61 : vector<8x32xf32>
    %63 = arith.addf %3, %62 : vector<8x32xf32>
    %c0_25 = arith.constant 0 : index
    %c0_26 = arith.constant 0 : index
    %c0_27 = arith.constant 0 : index
    %64 = vector.load %arg9[%c0_25, %c0_26, %c0_27] : memref<1x1x32xf32, #tpu.memory_space<vmem>>, vector<1x1x32xf32>
    %65 = vector.shape_cast %64 : vector<1x1x32xf32> to vector<1x32xf32>
    %c0_28 = arith.constant 0 : index
    %c0_29 = arith.constant 0 : index
    %c0_30 = arith.constant 0 : index
    %66 = vector.load %arg10[%c0_28, %c0_29, %c0_30] : memref<1x1x32xf32, #tpu.memory_space<vmem>>, vector<1x1x32xf32>
    %67 = vector.shape_cast %66 : vector<1x1x32xf32> to vector<1x32xf32>
    %cst_31 = arith.constant dense<0.000000e+00> : vector<8xf32>
    %68 = vector.multi_reduction <add>, %63, %cst_31 [1] : vector<8x32xf32> to vector<8xf32>
    %69 = vector.shape_cast %68 : vector<8xf32> to vector<8x1xf32>
    %cst_32 = arith.constant 3.200000e+01 : f32
    %70 = vector.broadcast %cst_32 : f32 to vector<8x1xf32>
    %71 = arith.divf %69, %70 : vector<8x1xf32>
    %72 = vector.broadcast %71 : vector<8x1xf32> to vector<8x32xf32>
    %73 = arith.subf %63, %72 : vector<8x32xf32>
    %74 = arith.mulf %73, %73 : vector<8x32xf32>
    %cst_33 = arith.constant dense<0.000000e+00> : vector<8xf32>
    %75 = vector.multi_reduction <add>, %74, %cst_33 [1] : vector<8x32xf32> to vector<8xf32>
    %76 = vector.shape_cast %75 : vector<8xf32> to vector<8x1xf32>
    %cst_34 = arith.constant 3.200000e+01 : f32
    %77 = vector.broadcast %cst_34 : f32 to vector<8x1xf32>
    %78 = arith.divf %76, %77 : vector<8x1xf32>
    %cst_35 = arith.constant 9.99999974E-6 : f32
    %79 = vector.broadcast %cst_35 : f32 to vector<8x1xf32>
    %80 = arith.addf %78, %79 : vector<8x1xf32>
    %81 = math.rsqrt %80 : vector<8x1xf32>
    %82 = vector.broadcast %81 : vector<8x1xf32> to vector<8x32xf32>
    %83 = arith.mulf %73, %82 : vector<8x32xf32>
    %84 = vector.broadcast %65 : vector<1x32xf32> to vector<8x32xf32>
    %85 = arith.mulf %83, %84 : vector<8x32xf32>
    %86 = vector.broadcast %67 : vector<1x32xf32> to vector<8x32xf32>
    %87 = arith.addf %85, %86 : vector<8x32xf32>
    %88 = arith.truncf %87 : vector<8x32xf32> to vector<8x32xbf16>
    %c0_36 = arith.constant 0 : index
    %c0_37 = arith.constant 0 : index
    %c0_38 = arith.constant 0 : index
    %89 = vector.load %arg11[%c0_36, %c0_37, %c0_38] : memref<1x32x64xbf16, #tpu.memory_space<vmem>>, vector<1x32x64xbf16>
    %90 = vector.shape_cast %89 : vector<1x32x64xbf16> to vector<32x64xbf16>
    %cst_39 = arith.constant dense<0.000000e+00> : vector<8x64xf32>
    %91 = tpu.matmul %88, %90, %cst_39 {dimension_numbers = #tpu.dot_dimension_numbers<[1], [0], [0], [1], [0, 0, 1, 1], [], []>} : vector<8x32xbf16>, vector<32x64xbf16>, vector<8x64xf32> -> vector<8x64xf32>
    %c0_40 = arith.constant 0 : index
    %c0_41 = arith.constant 0 : index
    %c0_42 = arith.constant 0 : index
    %92 = vector.load %arg12[%c0_40, %c0_41, %c0_42] : memref<1x1x64xf32, #tpu.memory_space<vmem>>, vector<1x1x64xf32>
    %93 = vector.shape_cast %92 : vector<1x1x64xf32> to vector<1x64xf32>
    %94 = vector.broadcast %93 : vector<1x64xf32> to vector<8x64xf32>
    %95 = arith.addf %91, %94 : vector<8x64xf32>
    %cst_43 = arith.constant 0.000000e+00 : f32
    %96 = vector.broadcast %cst_43 : f32 to vector<8x64xf32>
    %97 = arith.maximumf %95, %96 : vector<8x64xf32>
    %98 = arith.truncf %97 : vector<8x64xf32> to vector<8x64xbf16>
    %c0_44 = arith.constant 0 : index
    %c0_45 = arith.constant 0 : index
    %c0_46 = arith.constant 0 : index
    %99 = vector.load %arg13[%c0_44, %c0_45, %c0_46] : memref<1x64x32xbf16, #tpu.memory_space<vmem>>, vector<1x64x32xbf16>
    %100 = vector.shape_cast %99 : vector<1x64x32xbf16> to vector<64x32xbf16>
    %cst_47 = arith.constant dense<0.000000e+00> : vector<8x32xf32>
    %101 = tpu.matmul %98, %100, %cst_47 {dimension_numbers = #tpu.dot_dimension_numbers<[1], [0], [0], [1], [0, 0, 1, 1], [], []>} : vector<8x64xbf16>, vector<64x32xbf16>, vector<8x32xf32> -> vector<8x32xf32>
    %c0_48 = arith.constant 0 : index
    %c0_49 = arith.constant 0 : index
    %c0_50 = arith.constant 0 : index
    %102 = vector.load %arg14[%c0_48, %c0_49, %c0_50] : memref<1x1x32xf32, #tpu.memory_space<vmem>>, vector<1x1x32xf32>
    %103 = vector.shape_cast %102 : vector<1x1x32xf32> to vector<1x32xf32>
    %104 = vector.broadcast %103 : vector<1x32xf32> to vector<8x32xf32>
    %105 = arith.addf %101, %104 : vector<8x32xf32>
    %106 = arith.addf %87, %105 : vector<8x32xf32>
    %c0_51 = arith.constant 0 : index
    %c0_52 = arith.constant 0 : index
    %c0_53 = arith.constant 0 : index
    %107 = vector.load %arg15[%c0_51, %c0_52, %c0_53] : memref<1x1x32xf32, #tpu.memory_space<vmem>>, vector<1x1x32xf32>
    %108 = vector.shape_cast %107 : vector<1x1x32xf32> to vector<1x32xf32>
    %c0_54 = arith.constant 0 : index
    %c0_55 = arith.constant 0 : index
    %c0_56 = arith.constant 0 : index
    %109 = vector.load %arg16[%c0_54, %c0_55, %c0_56] : memref<1x1x32xf32, #tpu.memory_space<vmem>>, vector<1x1x32xf32>
    %110 = vector.shape_cast %109 : vector<1x1x32xf32> to vector<1x32xf32>
    %cst_57 = arith.constant dense<0.000000e+00> : vector<8xf32>
    %111 = vector.multi_reduction <add>, %106, %cst_57 [1] : vector<8x32xf32> to vector<8xf32>
    %112 = vector.shape_cast %111 : vector<8xf32> to vector<8x1xf32>
    %cst_58 = arith.constant 3.200000e+01 : f32
    %113 = vector.broadcast %cst_58 : f32 to vector<8x1xf32>
    %114 = arith.divf %112, %113 : vector<8x1xf32>
    %115 = vector.broadcast %114 : vector<8x1xf32> to vector<8x32xf32>
    %116 = arith.subf %106, %115 : vector<8x32xf32>
    %117 = arith.mulf %116, %116 : vector<8x32xf32>
    %cst_59 = arith.constant dense<0.000000e+00> : vector<8xf32>
    %118 = vector.multi_reduction <add>, %117, %cst_59 [1] : vector<8x32xf32> to vector<8xf32>
    %119 = vector.shape_cast %118 : vector<8xf32> to vector<8x1xf32>
    %cst_60 = arith.constant 3.200000e+01 : f32
    %120 = vector.broadcast %cst_60 : f32 to vector<8x1xf32>
    %121 = arith.divf %119, %120 : vector<8x1xf32>
    %cst_61 = arith.constant 9.99999974E-6 : f32
    %122 = vector.broadcast %cst_61 : f32 to vector<8x1xf32>
    %123 = arith.addf %121, %122 : vector<8x1xf32>
    %124 = math.rsqrt %123 : vector<8x1xf32>
    %125 = vector.broadcast %124 : vector<8x1xf32> to vector<8x32xf32>
    %126 = arith.mulf %116, %125 : vector<8x32xf32>
    %127 = vector.broadcast %108 : vector<1x32xf32> to vector<8x32xf32>
    %128 = arith.mulf %126, %127 : vector<8x32xf32>
    %129 = vector.broadcast %110 : vector<1x32xf32> to vector<8x32xf32>
    %130 = arith.addf %128, %129 : vector<8x32xf32>
    %131 = vector.broadcast %5 : vector<8x1xf32> to vector<8x32xf32>
    %132 = arith.mulf %130, %131 : vector<8x32xf32>
    %c0_62 = arith.constant 0 : index
    %c0_63 = arith.constant 0 : index
    %133 = vector.load %arg18[%c0_62, %c0_63] : memref<8x32xf32, #tpu.memory_space<vmem>>, vector<8x32xf32>
    tpu.vector_store %arg18[%c0_62, %c0_63], %132 {strides = array<i32>} : memref<8x32xf32, #tpu.memory_space<vmem>>, vector<8x32xf32>,
    %c1_i32 = arith.constant 1 : i32
    %134 = arith.cmpi eq, %arg1, %c1_i32 : i32
    %135 = arith.extui %134 : i1 to i32
    %c0_i32_64 = arith.constant 0 : i32
    %136 = arith.cmpi ne, %135, %c0_i32_64 : i32
    scf.if %136 {
      %cst_65 = arith.constant dense<0.000000e+00> : vector<1xf32>
      %137 = vector.multi_reduction <add>, %5, %cst_65 [0] : vector<8x1xf32> to vector<1xf32>
      %138 = vector.shape_cast %137 : vector<1xf32> to vector<1x1xf32>
      %cst_66 = arith.constant 1.000000e-07 : f32
      %139 = vector.broadcast %cst_66 : f32 to vector<1x1xf32>
      %140 = arith.maximumf %138, %139 : vector<1x1xf32>
      %cst_67 = arith.constant dense<0.000000e+00> : vector<32xf32>
      %141 = vector.multi_reduction <add>, %132, %cst_67 [0] : vector<8x32xf32> to vector<32xf32>
      %142 = vector.shape_cast %141 : vector<32xf32> to vector<1x32xf32>
      %143 = vector.broadcast %140 : vector<1x1xf32> to vector<1x32xf32>
      %144 = arith.divf %142, %143 : vector<1x32xf32>
      %145 = vector.shape_cast %144 : vector<1x32xf32> to vector<1x1x32xf32>
      %c0_68 = arith.constant 0 : index
      %c0_69 = arith.constant 0 : index
      %c0_70 = arith.constant 0 : index
      %146 = vector.load %arg17[%c0_68, %c0_69, %c0_70] : memref<1x1x32xf32, #tpu.memory_space<vmem>>, vector<1x1x32xf32>
      tpu.vector_store %arg17[%c0_68, %c0_69, %c0_70], %145 {strides = array<i32>} : memref<1x1x32xf32, #tpu.memory_space<vmem>>, vector<1x1x32xf32>,
    } else {
    }
    return
  }
  func.func @transform_0(%arg0: i32, %arg1: i32) -> (i32, i32, i32) {
    %c0_i32 = arith.constant 0 : i32
    %c0_i32_0 = arith.constant 0 : i32
    %c0_i32_1 = arith.constant 0 : i32
    return %arg0, %c0_i32, %c0_i32_0 : i32, i32, i32
  }
  func.func @transform_1(%arg0: i32, %arg1: i32) -> (i32, i32, i32) {
    %c0_i32 = arith.constant 0 : i32
    %c0_i32_0 = arith.constant 0 : i32
    %c0_i32_1 = arith.constant 0 : i32
    return %arg0, %c0_i32, %c0_i32_0 : i32, i32, i32
  }
  func.func @transform_2(%arg0: i32, %arg1: i32) -> (i32, i32, i32) {
    %c0_i32 = arith.constant 0 : i32
    %c0_i32_0 = arith.constant 0 : i32
    %c0_i32_1 = arith.constant 0 : i32
    return %arg0, %c0_i32, %c0_i32_0 : i32, i32, i32
  }
  func.func @transform_3(%arg0: i32, %arg1: i32) -> (i32, i32, i32) {
    %c0_i32 = arith.constant 0 : i32
    %c0_i32_0 = arith.constant 0 : i32
    %c0_i32_1 = arith.constant 0 : i32
    return %arg1, %c0_i32, %c0_i32_0 : i32, i32, i32
  }
  func.func @transform_4(%arg0: i32, %arg1: i32) -> (i32, i32, i32) {
    %c0_i32 = arith.constant 0 : i32
    %c0_i32_0 = arith.constant 0 : i32
    %c0_i32_1 = arith.constant 0 : i32
    return %arg1, %c0_i32, %c0_i32_0 : i32, i32, i32
  }
  func.func @transform_5(%arg0: i32, %arg1: i32) -> (i32, i32, i32) {
    %c0_i32 = arith.constant 0 : i32
    %c0_i32_0 = arith.constant 0 : i32
    %c0_i32_1 = arith.constant 0 : i32
    return %arg1, %c0_i32, %c0_i32_0 : i32, i32, i32
  }
  func.func @transform_6(%arg0: i32, %arg1: i32) -> (i32, i32, i32) {
    %c0_i32 = arith.constant 0 : i32
    %c0_i32_0 = arith.constant 0 : i32
    %c0_i32_1 = arith.constant 0 : i32
    return %arg1, %c0_i32, %c0_i32_0 : i32, i32, i32
  }
  func.func @transform_7(%arg0: i32, %arg1: i32) -> (i32, i32, i32) {
    %c0_i32 = arith.constant 0 : i32
    %c0_i32_0 = arith.constant 0 : i32
    %c0_i32_1 = arith.constant 0 : i32
    return %arg1, %c0_i32, %c0_i32_0 : i32, i32, i32
  }
  func.func @transform_8(%arg0: i32, %arg1: i32) -> (i32, i32, i32) {
    %c0_i32 = arith.constant 0 : i32
    %c0_i32_0 = arith.constant 0 : i32
    %c0_i32_1 = arith.constant 0 : i32
    return %arg1, %c0_i32, %c0_i32_0 : i32, i32, i32
  }
  func.func @transform_9(%arg0: i32, %arg1: i32) -> (i32, i32, i32) {
    %c0_i32 = arith.constant 0 : i32
    %c0_i32_0 = arith.constant 0 : i32
    %c0_i32_1 = arith.constant 0 : i32
    return %arg1, %c0_i32, %c0_i32_0 : i32, i32, i32
  }
  func.func @transform_10(%arg0: i32, %arg1: i32) -> (i32, i32, i32) {
    %c0_i32 = arith.constant 0 : i32
    %c0_i32_0 = arith.constant 0 : i32
    %c0_i32_1 = arith.constant 0 : i32
    return %arg1, %c0_i32, %c0_i32_0 : i32, i32, i32
  }
  func.func @transform_11(%arg0: i32, %arg1: i32) -> (i32, i32, i32) {
    %c0_i32 = arith.constant 0 : i32
    %c0_i32_0 = arith.constant 0 : i32
    %c0_i32_1 = arith.constant 0 : i32
    return %arg1, %c0_i32, %c0_i32_0 : i32, i32, i32
  }
  func.func @transform_12(%arg0: i32, %arg1: i32) -> (i32, i32, i32) {
    %c0_i32 = arith.constant 0 : i32
    %c0_i32_0 = arith.constant 0 : i32
    %c0_i32_1 = arith.constant 0 : i32
    return %arg1, %c0_i32, %c0_i32_0 : i32, i32, i32
  }
  func.func @transform_13(%arg0: i32, %arg1: i32) -> (i32, i32, i32) {
    %c0_i32 = arith.constant 0 : i32
    %c0_i32_0 = arith.constant 0 : i32
    %c0_i32_1 = arith.constant 0 : i32
    return %arg1, %c0_i32, %c0_i32_0 : i32, i32, i32
  }
  func.func @transform_14(%arg0: i32, %arg1: i32) -> (i32, i32, i32) {
    %c0_i32 = arith.constant 0 : i32
    %c0_i32_0 = arith.constant 0 : i32
    %c0_i32_1 = arith.constant 0 : i32
    return %arg1, %c0_i32, %c0_i32_0 : i32, i32, i32
  }
  func.func @transform_15(%arg0: i32, %arg1: i32) -> (i32, i32, i32) {
    %c0_i32 = arith.constant 0 : i32
    %c0_i32_0 = arith.constant 0 : i32
    %c0_i32_1 = arith.constant 0 : i32
    return %arg0, %c0_i32, %c0_i32_0 : i32, i32, i32
  }
}

</mosaic_0001>

<llo_original>
// kernel: tpu_custom_call.1
$region0: #{tpu_custom_call.1}
  #allocation0 [shape = 'u32[]', space=smem, size = 0x4, offset = 0x4, fixed_abs, tag = 'smem constant byte address 0x4 - core index']
  #allocation1 [shape = 'u32[144,128]{1,0:T(1,128)}', space=vmem, size = 0x12000, scoped, tag = 'internal scratch']
  #allocation2 [shape = 'f32[8,32]{1,0:T(8,128)}', space=vmem, size = 0x1000, scoped, tag = 'scratch operand']
  %s0 = inlined_call_operand.vmem [shape: f32[2,8,32], index: 0, kind: input, shape index: {}]
  %s1 = inlined_call_operand.vmem [shape: f32[2,8,1], index: 1, kind: input, shape index: {}]
  %s2 = inlined_call_operand.vmem [shape: f32[2,1,8], index: 2, kind: input, shape index: {}]
  %s3 = inlined_call_operand.vmem [shape: bf16[2,32,96], index: 3, kind: input, shape index: {}]
  %s4 = inlined_call_operand.vmem [shape: f32[2,1,96], index: 4, kind: input, shape index: {}]
  %s5 = inlined_call_operand.vmem [shape: bf16[2,32,32], index: 5, kind: input, shape index: {}]
  %s6 = inlined_call_operand.vmem [shape: f32[2,1,32], index: 6, kind: input, shape index: {}]
  %s7 = inlined_call_operand.vmem [shape: f32[2,1,32], index: 7, kind: input, shape index: {}]
  %s8 = inlined_call_operand.vmem [shape: f32[2,1,32], index: 8, kind: input, shape index: {}]
  %s9 = inlined_call_operand.vmem [shape: bf16[2,32,64], index: 9, kind: input, shape index: {}]
  %s10 = inlined_call_operand.hbm [shape: f32[2,1,64], index: 10, kind: input, shape index: {}]
  %s11 = inlined_call_operand.vmem [shape: bf16[2,64,32], index: 11, kind: input, shape index: {}]
  %s12 = inlined_call_operand.vmem [shape: f32[2,1,32], index: 12, kind: input, shape index: {}]
  %s13 = inlined_call_operand.vmem [shape: f32[2,1,32], index: 13, kind: input, shape index: {}]
  %s14 = inlined_call_operand.vmem [shape: f32[2,1,32], index: 14, kind: input, shape index: {}]
  %s15 = inlined_call_operand.hbm [shape: f32[2,1,32], index: 15, kind: output, shape index: {}]
  %s16 = sld [smem:[#allocation0]]
  $region105: #{tpu_custom_call.1} parent=0
    _
  %s18 = ssub.s32 1, %s16
  %s19 = scalar_select 0, %s18, %s16
  $region1: #{tpu_custom_call.1} parent=0
    #allocation3 [shape = 'u8[1024]{0}', space=vmem, size = 0x400, scoped, tag = 'input window, operand 10']
    #allocation4 [shape = 's32[2]{0}', space=sflag, size = 0x8, scoped, tag = 'scoped memory for tpu_custom_call.1']
    #allocation5 [shape = 's32[2]{0}', space=sflag, size = 0x8, scoped, tag = 'scoped memory for tpu_custom_call.1']
    #allocation6 [shape = 'u8[1024]{0}', space=vmem, size = 0x400, scoped, tag = 'output window, operand 0']
    %20 = vsyncpa [#allocation4], 0
    %s21 = scalar_lea.sflag [#allocation4], 1
    %22 = vsyncpa %s21, 0
    %23 = vsyncpa [#allocation5], 0
    %s24 = scalar_lea.sflag [#allocation5], 1
    %25 = vsyncpa %s24, 0
    loop: start=0, step=1, limit=6
    $region2: #{tpu_custom_call.1} parent=1 // loop_pre_header
      _
    $region3: #{tpu_custom_call.1} parent=1 // loop_header
      %s27 = sphi 0, %s31
      %p28 = scmp.ge.s32.totalorder %s27, 6
      %s34 = sphi 0, %s46
      %s35 = sphi 0, %s42
      %s36 = sphi 0, %s34
      %s37 = sphi 0, %s35
      %s38 = sphi 0, %s36
      %s39 = sphi 0, %s37
      %s49 = sphi 0, %s51
      %s52 = sphi 0, %s49
      %s53 = sphi 0, %s52
      %s69 = sphi 0, %s53
      %s75 = sphi 0, %s77
      %s78 = sphi 0, %s75
      %s79 = sphi 0, %s78
      %s95 = sphi 0, %s79
      %s101 = sphi 0, %s103
      %s104 = sphi 0, %s101
      %s105 = sphi 0, %s104
      %s121 = sphi 0, %s105
      %s127 = sphi 0, %s129
      %s130 = sphi 0, %s127
      %s131 = sphi 0, %s130
      %s147 = sphi 0, %s131
      %s153 = sphi 0, %s155
      %s156 = sphi 0, %s153
      %s157 = sphi 0, %s156
      %s173 = sphi 0, %s157
      %s179 = sphi 0, %s181
      %s182 = sphi 0, %s179
      %s183 = sphi 0, %s182
      %s199 = sphi 0, %s183
      %s205 = sphi 0, %s207
      %s208 = sphi 0, %s205
      %s209 = sphi 0, %s208
      %s225 = sphi 0, %s209
      %s231 = sphi 0, %s233
      %s234 = sphi 0, %s231
      %s235 = sphi 0, %s234
      %s251 = sphi 0, %s235
      %s257 = sphi 0, %s259
      %s260 = sphi 0, %s257
      %s261 = sphi 0, %s260
      %s277 = sphi 0, %s261
      %s283 = sphi 0, %s285
      %s286 = sphi 0, %s283
      %s287 = sphi 0, %s286
      %s303 = sphi 0, %s287
      %s309 = sphi 0, %s311
      %s312 = sphi 0, %s309
      %s313 = sphi 0, %s312
      %s329 = sphi 0, %s313
      %s335 = sphi 0, %s337
      %s338 = sphi 0, %s335
      %s339 = sphi 0, %s338
      %s355 = sphi 0, %s339
      %s361 = sphi 0, %s363
      %s364 = sphi 0, %s361
      %s365 = sphi 0, %s364
      %s381 = sphi 0, %s365
      %s387 = sphi 0, %s389
      %s390 = sphi 0, %s387
      %s391 = sphi 0, %s390
      %s407 = sphi 0, %s391
      %s413 = sphi 0, %s415
      %s416 = sphi 0, %s413
      %s417 = sphi 0, %s416
      %s433 = sphi 0, %s417
      %s439 = sphi 0, %s441
      %s442 = sphi 0, %s439
      %s443 = sphi 0, %s442
      %s459 = sphi 0, %s443
    $region4: #{tpu_custom_call.1} parent=1 // loop_header_branch
      %30 = sbr.rel (%p28) target = $region8
    $region5: #{tpu_custom_call.1} parent=1 // loop_body
      %s32 = ssub.s32 %s27, 1
      %s33 = ssub.s32 %s27, 2
      %s40 = sadd.s32 1, %s35
      %p41 = scmp.ge.s32.totalorder %s40, 2
      %s42 = scalar_select %p41, 0, %s40
      %s43 = sadd.s32 1, %s34
      %s44 = scalar_select %p41, %s43, %s34
      %p45 = scmp.ge.s32.totalorder %s44, 2
      %s46 = scalar_select %p45, 0, %s44
      %s47 = ssub.s32 %s34, %s46
      %p48 = scmp.eq.s32.totalorder %s47, 0
      %s50 = sadd.s32 %s49, 1
      %s51 = scalar_select %p48, %s49, %s50
      %p54 = pneg %p48
      %p55 = scmp.eq.s32.totalorder %s27, 3
      %p56 = por %p54, %p55
      %p57 = scmp.ne.s32.totalorder %s49, %s52
      %p58 = scmp.eq.s32.totalorder %s27, 0
      %p59 = por %p57, %p58
      %p60 = scmp.ne.s32.totalorder %s49, %s52
      %p61 = scmp.eq.s32.totalorder %s32, 3
      %p62 = por %p60, %p61
      %p63 = scmp.ne.s32.totalorder %s52, %s53
      %p64 = scmp.eq.s32.totalorder %s32, 0
      %p65 = por %p63, %p64
      %p66 = scmp.ne.s32.totalorder %s52, %s53
      %p67 = scmp.eq.s32.totalorder %s33, 3
      %p68 = por %p66, %p67
      %p70 = scmp.ne.s32.totalorder %s53, %s69
      %p71 = scmp.eq.s32.totalorder %s33, 0
      %p72 = por %p70, %p71
      %s73 = ssub.s32 %s34, %s46
      %p74 = scmp.eq.s32.totalorder %s73, 0
      %s76 = sadd.s32 %s75, 1
      %s77 = scalar_select %p74, %s75, %s76
      %p80 = pneg %p74
      %p81 = scmp.eq.s32.totalorder %s27, 3
      %p82 = por %p80, %p81
      %p83 = scmp.ne.s32.totalorder %s75, %s78
      %p84 = scmp.eq.s32.totalorder %s27, 0
      %p85 = por %p83, %p84
      %p86 = scmp.ne.s32.totalorder %s75, %s78
      %p87 = scmp.eq.s32.totalorder %s32, 3
      %p88 = por %p86, %p87
      %p89 = scmp.ne.s32.totalorder %s78, %s79
      %p90 = scmp.eq.s32.totalorder %s32, 0
      %p91 = por %p89, %p90
      %p92 = scmp.ne.s32.totalorder %s78, %s79
      %p93 = scmp.eq.s32.totalorder %s33, 3
      %p94 = por %p92, %p93
      %p96 = scmp.ne.s32.totalorder %s79, %s95
      %p97 = scmp.eq.s32.totalorder %s33, 0
      %p98 = por %p96, %p97
      %s99 = ssub.s32 %s34, %s46
      %p100 = scmp.eq.s32.totalorder %s99, 0
      %s102 = sadd.s32 %s101, 1
      %s103 = scalar_select %p100, %s101, %s102
      %p106 = pneg %p100
      %p107 = scmp.eq.s32.totalorder %s27, 3
      %p108 = por %p106, %p107
      %p109 = scmp.ne.s32.totalorder %s101, %s104
      %p110 = scmp.eq.s32.totalorder %s27, 0
      %p111 = por %p109, %p110
      %p112 = scmp.ne.s32.totalorder %s101, %s104
      %p113 = scmp.eq.s32.totalorder %s32, 3
      %p114 = por %p112, %p113
      %p115 = scmp.ne.s32.totalorder %s104, %s105
      %p116 = scmp.eq.s32.totalorder %s32, 0
      %p117 = por %p115, %p116
      %p118 = scmp.ne.s32.totalorder %s104, %s105
      %p119 = scmp.eq.s32.totalorder %s33, 3
      %p120 = por %p118, %p119
      %p122 = scmp.ne.s32.totalorder %s105, %s121
      %p123 = scmp.eq.s32.totalorder %s33, 0
      %p124 = por %p122, %p123
      %s125 = ssub.s32 %s35, %s42
      %p126 = scmp.eq.s32.totalorder %s125, 0
      %s128 = sadd.s32 %s127, 1
      %s129 = scalar_select %p126, %s127, %s128
      %p132 = pneg %p126
      %p133 = scmp.eq.s32.totalorder %s27, 3
      %p134 = por %p132, %p133
      %p135 = scmp.ne.s32.totalorder %s127, %s130
      %p136 = scmp.eq.s32.totalorder %s27, 0
      %p137 = por %p135, %p136
      %p138 = scmp.ne.s32.totalorder %s127, %s130
      %p139 = scmp.eq.s32.totalorder %s32, 3
      %p140 = por %p138, %p139
      %p141 = scmp.ne.s32.totalorder %s130, %s131
      %p142 = scmp.eq.s32.totalorder %s32, 0
      %p143 = por %p141, %p142
      %p144 = scmp.ne.s32.totalorder %s130, %s131
      %p145 = scmp.eq.s32.totalorder %s33, 3
      %p146 = por %p144, %p145
      %p148 = scmp.ne.s32.totalorder %s131, %s147
      %p149 = scmp.eq.s32.totalorder %s33, 0
      %p150 = por %p148, %p149
      %s151 = ssub.s32 %s35, %s42
      %p152 = scmp.eq.s32.totalorder %s151, 0
      %s154 = sadd.s32 %s153, 1
      %s155 = scalar_select %p152, %s153, %s154
      %p158 = pneg %p152
      %p159 = scmp.eq.s32.totalorder %s27, 3
      %p160 = por %p158, %p159
      %p161 = scmp.ne.s32.totalorder %s153, %s156
      %p162 = scmp.eq.s32.totalorder %s27, 0
      %p163 = por %p161, %p162
      %p164 = scmp.ne.s32.totalorder %s153, %s156
      %p165 = scmp.eq.s32.totalorder %s32, 3
      %p166 = por %p164, %p165
      %p167 = scmp.ne.s32.totalorder %s156, %s157
      %p168 = scmp.eq.s32.totalorder %s32, 0
      %p169 = por %p167, %p168
      %p170 = scmp.ne.s32.totalorder %s156, %s157
      %p171 = scmp.eq.s32.totalorder %s33, 3
      %p172 = por %p170, %p171
      %p174 = scmp.ne.s32.totalorder %s157, %s173
      %p175 = scmp.eq.s32.totalorder %s33, 0
      %p176 = por %p174, %p175
      %s177 = ssub.s32 %s35, %s42
      %p178 = scmp.eq.s32.totalorder %s177, 0
      %s180 = sadd.s32 %s179, 1
      %s181 = scalar_select %p178, %s179, %s180
      %p184 = pneg %p178
      %p185 = scmp.eq.s32.totalorder %s27, 3
      %p186 = por %p184, %p185
      %p187 = scmp.ne.s32.totalorder %s179, %s182
      %p188 = scmp.eq.s32.totalorder %s27, 0
      %p189 = por %p187, %p188
      %p190 = scmp.ne.s32.totalorder %s179, %s182
      %p191 = scmp.eq.s32.totalorder %s32, 3
      %p192 = por %p190, %p191
      %p193 = scmp.ne.s32.totalorder %s182, %s183
      %p194 = scmp.eq.s32.totalorder %s32, 0
      %p195 = por %p193, %p194
      %p196 = scmp.ne.s32.totalorder %s182, %s183
      %p197 = scmp.eq.s32.totalorder %s33, 3
      %p198 = por %p196, %p197
      %p200 = scmp.ne.s32.totalorder %s183, %s199
      %p201 = scmp.eq.s32.totalorder %s33, 0
      %p202 = por %p200, %p201
      %s203 = ssub.s32 %s35, %s42
      %p204 = scmp.eq.s32.totalorder %s203, 0
      %s206 = sadd.s32 %s205, 1
      %s207 = scalar_select %p204, %s205, %s206
      %p210 = pneg %p204
      %p211 = scmp.eq.s32.totalorder %s27, 3
      %p212 = por %p210, %p211
      %p213 = scmp.ne.s32.totalorder %s205, %s208
      %p214 = scmp.eq.s32.totalorder %s27, 0
      %p215 = por %p213, %p214
      %p216 = scmp.ne.s32.totalorder %s205, %s208
      %p217 = scmp.eq.s32.totalorder %s32, 3
      %p218 = por %p216, %p217
      %p219 = scmp.ne.s32.totalorder %s208, %s209
      %p220 = scmp.eq.s32.totalorder %s32, 0
      %p221 = por %p219, %p220
      %p222 = scmp.ne.s32.totalorder %s208, %s209
      %p223 = scmp.eq.s32.totalorder %s33, 3
      %p224 = por %p222, %p223
      %p226 = scmp.ne.s32.totalorder %s209, %s225
      %p227 = scmp.eq.s32.totalorder %s33, 0
      %p228 = por %p226, %p227
      %s229 = ssub.s32 %s35, %s42
      %p230 = scmp.eq.s32.totalorder %s229, 0
      %s232 = sadd.s32 %s231, 1
      %s233 = scalar_select %p230, %s231, %s232
      %p236 = pneg %p230
      %p237 = scmp.eq.s32.totalorder %s27, 3
      %p238 = por %p236, %p237
      %p239 = scmp.ne.s32.totalorder %s231, %s234
      %p240 = scmp.eq.s32.totalorder %s27, 0
      %p241 = por %p239, %p240
      %p242 = scmp.ne.s32.totalorder %s231, %s234
      %p243 = scmp.eq.s32.totalorder %s32, 3
      %p244 = por %p242, %p243
      %p245 = scmp.ne.s32.totalorder %s234, %s235
      %p246 = scmp.eq.s32.totalorder %s32, 0
      %p247 = por %p245, %p246
      %p248 = scmp.ne.s32.totalorder %s234, %s235
      %p249 = scmp.eq.s32.totalorder %s33, 3
      %p250 = por %p248, %p249
      %p252 = scmp.ne.s32.totalorder %s235, %s251
      %p253 = scmp.eq.s32.totalorder %s33, 0
      %p254 = por %p252, %p253
      %s255 = ssub.s32 %s35, %s42
      %p256 = scmp.eq.s32.totalorder %s255, 0
      %s258 = sadd.s32 %s257, 1
      %s259 = scalar_select %p256, %s257, %s258
      %p262 = pneg %p256
      %p263 = scmp.eq.s32.totalorder %s27, 3
      %p264 = por %p262, %p263
      %p265 = scmp.ne.s32.totalorder %s257, %s260
      %p266 = scmp.eq.s32.totalorder %s27, 0
      %p267 = por %p265, %p266
      %p268 = scmp.ne.s32.totalorder %s257, %s260
      %p269 = scmp.eq.s32.totalorder %s32, 3
      %p270 = por %p268, %p269
      %p271 = scmp.ne.s32.totalorder %s260, %s261
      %p272 = scmp.eq.s32.totalorder %s32, 0
      %p273 = por %p271, %p272
      %p274 = scmp.ne.s32.totalorder %s260, %s261
      %p275 = scmp.eq.s32.totalorder %s33, 3
      %p276 = por %p274, %p275
      %p278 = scmp.ne.s32.totalorder %s261, %s277
      %p279 = scmp.eq.s32.totalorder %s33, 0
      %p280 = por %p278, %p279
      %s281 = ssub.s32 %s35, %s42
      %p282 = scmp.eq.s32.totalorder %s281, 0
      %s284 = sadd.s32 %s283, 1
      %s285 = scalar_select %p282, %s283, %s284
      %p288 = pneg %p282
      %p289 = scmp.eq.s32.totalorder %s27, 3
      %p290 = por %p288, %p289
      %p291 = scmp.ne.s32.totalorder %s283, %s286
      %p292 = scmp.eq.s32.totalorder %s27, 0
      %p293 = por %p291, %p292
      %p294 = scmp.ne.s32.totalorder %s283, %s286
      %p295 = scmp.eq.s32.totalorder %s32, 3
      %p296 = por %p294, %p295
      %p297 = scmp.ne.s32.totalorder %s286, %s287
      %p298 = scmp.eq.s32.totalorder %s32, 0
      %p299 = por %p297, %p298
      %p300 = scmp.ne.s32.totalorder %s286, %s287
      %p301 = scmp.eq.s32.totalorder %s33, 3
      %p302 = por %p300, %p301
      %p304 = scmp.ne.s32.totalorder %s287, %s303
      %p305 = scmp.eq.s32.totalorder %s33, 0
      %p306 = por %p304, %p305
      %s307 = ssub.s32 %s35, %s42
      %p308 = scmp.eq.s32.totalorder %s307, 0
      %s310 = sadd.s32 %s309, 1
      %s311 = scalar_select %p308, %s309, %s310
      %p314 = pneg %p308
      %p315 = scmp.eq.s32.totalorder %s27, 3
      %p316 = por %p314, %p315
      %p317 = scmp.ne.s32.totalorder %s309, %s312
      %p318 = scmp.eq.s32.totalorder %s27, 0
      %p319 = por %p317, %p318
      %p320 = scmp.ne.s32.totalorder %s309, %s312
      %p321 = scmp.eq.s32.totalorder %s32, 3
      %p322 = por %p320, %p321
      %p323 = scmp.ne.s32.totalorder %s312, %s313
      %p324 = scmp.eq.s32.totalorder %s32, 0
      %p325 = por %p323, %p324
      %p326 = scmp.ne.s32.totalorder %s312, %s313
      %p327 = scmp.eq.s32.totalorder %s33, 3
      %p328 = por %p326, %p327
      %p330 = scmp.ne.s32.totalorder %s313, %s329
      %p331 = scmp.eq.s32.totalorder %s33, 0
      %p332 = por %p330, %p331
      %s333 = ssub.s32 %s35, %s42
      %p334 = scmp.eq.s32.totalorder %s333, 0
      %s336 = sadd.s32 %s335, 1
      %s337 = scalar_select %p334, %s335, %s336
      %p340 = pneg %p334
      %p341 = scmp.eq.s32.totalorder %s27, 3
      %p342 = por %p340, %p341
      %p343 = scmp.ne.s32.totalorder %s335, %s338
      %p344 = scmp.eq.s32.totalorder %s27, 0
      %p345 = por %p343, %p344
      %p346 = scmp.ne.s32.totalorder %s335, %s338
      %p347 = scmp.eq.s32.totalorder %s32, 3
      %p348 = por %p346, %p347
      %p349 = scmp.ne.s32.totalorder %s338, %s339
      %p350 = scmp.eq.s32.totalorder %s32, 0
      %p351 = por %p349, %p350
      %p352 = scmp.ne.s32.totalorder %s338, %s339
      %p353 = scmp.eq.s32.totalorder %s33, 3
      %p354 = por %p352, %p353
      %p356 = scmp.ne.s32.totalorder %s339, %s355
      %p357 = scmp.eq.s32.totalorder %s33, 0
      %p358 = por %p356, %p357
      %s359 = ssub.s32 %s35, %s42
      %p360 = scmp.eq.s32.totalorder %s359, 0
      %s362 = sadd.s32 %s361, 1
      %s363 = scalar_select %p360, %s361, %s362
      %p366 = pneg %p360
      %p367 = scmp.eq.s32.totalorder %s27, 3
      %p368 = por %p366, %p367
      %p369 = scmp.ne.s32.totalorder %s361, %s364
      %p370 = scmp.eq.s32.totalorder %s27, 0
      %p371 = por %p369, %p370
      %p372 = scmp.ne.s32.totalorder %s361, %s364
      %p373 = scmp.eq.s32.totalorder %s32, 3
      %p374 = por %p372, %p373
      %p375 = scmp.ne.s32.totalorder %s364, %s365
      %p376 = scmp.eq.s32.totalorder %s32, 0
      %p377 = por %p375, %p376
      %p378 = scmp.ne.s32.totalorder %s364, %s365
      %p379 = scmp.eq.s32.totalorder %s33, 3
      %p380 = por %p378, %p379
      %p382 = scmp.ne.s32.totalorder %s365, %s381
      %p383 = scmp.eq.s32.totalorder %s33, 0
      %p384 = por %p382, %p383
      %s385 = ssub.s32 %s35, %s42
      %p386 = scmp.eq.s32.totalorder %s385, 0
      %s388 = sadd.s32 %s387, 1
      %s389 = scalar_select %p386, %s387, %s388
      %p392 = pneg %p386
      %p393 = scmp.eq.s32.totalorder %s27, 3
      %p394 = por %p392, %p393
      %p395 = scmp.ne.s32.totalorder %s387, %s390
      %p396 = scmp.eq.s32.totalorder %s27, 0
      %p397 = por %p395, %p396
      %p398 = scmp.ne.s32.totalorder %s387, %s390
      %p399 = scmp.eq.s32.totalorder %s32, 3
      %p400 = por %p398, %p399
      %p401 = scmp.ne.s32.totalorder %s390, %s391
      %p402 = scmp.eq.s32.totalorder %s32, 0
      %p403 = por %p401, %p402
      %p404 = scmp.ne.s32.totalorder %s390, %s391
      %p405 = scmp.eq.s32.totalorder %s33, 3
      %p406 = por %p404, %p405
      %p408 = scmp.ne.s32.totalorder %s391, %s407
      %p409 = scmp.eq.s32.totalorder %s33, 0
      %p410 = por %p408, %p409
      %s411 = ssub.s32 %s35, %s42
      %p412 = scmp.eq.s32.totalorder %s411, 0
      %s414 = sadd.s32 %s413, 1
      %s415 = scalar_select %p412, %s413, %s414
      %p418 = pneg %p412
      %p419 = scmp.eq.s32.totalorder %s27, 3
      %p420 = por %p418, %p419
      %p421 = scmp.ne.s32.totalorder %s413, %s416
      %p422 = scmp.eq.s32.totalorder %s27, 0
      %p423 = por %p421, %p422
      %p424 = scmp.ne.s32.totalorder %s413, %s416
      %p425 = scmp.eq.s32.totalorder %s32, 3
      %p426 = por %p424, %p425
      %p427 = scmp.ne.s32.totalorder %s416, %s417
      %p428 = scmp.eq.s32.totalorder %s32, 0
      %p429 = por %p427, %p428
      %p430 = scmp.ne.s32.totalorder %s416, %s417
      %p431 = scmp.eq.s32.totalorder %s33, 3
      %p432 = por %p430, %p431
      %p434 = scmp.ne.s32.totalorder %s417, %s433
      %p435 = scmp.eq.s32.totalorder %s33, 0
      %p436 = por %p434, %p435
      %s437 = ssub.s32 %s34, %s46
      %p438 = scmp.eq.s32.totalorder %s437, 0
      %s440 = sadd.s32 %s439, 1
      %s441 = scalar_select %p438, %s439, %s440
      %p444 = pneg %p438
      %p445 = scmp.eq.s32.totalorder %s27, 3
      %p446 = por %p444, %p445
      %p447 = scmp.ne.s32.totalorder %s439, %s442
      %p448 = scmp.eq.s32.totalorder %s27, 0
      %p449 = por %p447, %p448
      %p450 = scmp.ne.s32.totalorder %s439, %s442
      %p451 = scmp.eq.s32.totalorder %s32, 3
      %p452 = por %p450, %p451
      %p453 = scmp.ne.s32.totalorder %s442, %s443
      %p454 = scmp.eq.s32.totalorder %s32, 0
      %p455 = por %p453, %p454
      %p456 = scmp.ne.s32.totalorder %s442, %s443
      %p457 = scmp.eq.s32.totalorder %s33, 3
      %p458 = por %p456, %p457
      %p460 = scmp.ne.s32.totalorder %s443, %s459
      %p461 = scmp.eq.s32.totalorder %s33, 0
      %p462 = por %p460, %p461
      %p463 = scmp.le.s32.totalorder 1, %s27
      %p464 = scmp.lt.s32.totalorder %s27, 5
      %p465 = pnand %p463, %p464
      %p466 = pneg %p465
      // Predicated region
      $region9: #{tpu_custom_call.1} parent=5 // pred_check
        _
      $region10: #{tpu_custom_call.1} parent=5 // pred_check_branch
        %468 = sbr.rel (%p465) target = $region12
      $region11: #{tpu_custom_call.1} parent=5 // pred_region
        %s469 = ssub.s32 %s27, 1
      $region12: #{tpu_custom_call.1} parent=5 // pred_fallthru
        _
      %p470 = scmp.lt.s32.totalorder %s27, 4
      // Predicated region
      $region13: #{tpu_custom_call.1} parent=5 // pred_check
        %p471 = pneg %p470
      $region14: #{tpu_custom_call.1} parent=5 // pred_check_branch
        %473 = sbr.rel (%p471) target = $region16
      $region15: #{tpu_custom_call.1} parent=5 // pred_region
        // Predicated region
        $region17: #{tpu_custom_call.1} parent=15 // pred_check
          %p474 = pneg %p59
        $region18: #{tpu_custom_call.1} parent=15 // pred_check_branch
          %476 = sbr.rel (%p474) target = $region20
        $region19: #{tpu_custom_call.1} parent=15 // pred_region
          %p477 = scmp.lt.s32.totalorder %s34, 1
          %s478 = scalar_select %p477, %s34, 1
          %s479 = smul.addr %s478, 8
          %s480 = scalar_lea.vmem %s0, %s479
        $region20: #{tpu_custom_call.1} parent=15 // pred_fallthru
          _
        // Predicated region
        $region21: #{tpu_custom_call.1} parent=15 // pred_check
          %p481 = pneg %p85
        $region22: #{tpu_custom_call.1} parent=15 // pred_check_branch
          %483 = sbr.rel (%p481) target = $region24
        $region23: #{tpu_custom_call.1} parent=15 // pred_region
          %p484 = scmp.lt.s32.totalorder %s34, 1
          %s485 = scalar_select %p484, %s34, 1
          %s486 = smul.addr %s485, 8
          %s487 = scalar_lea.vmem %s1, %s486
        $region24: #{tpu_custom_call.1} parent=15 // pred_fallthru
          _
        // Predicated region
        $region25: #{tpu_custom_call.1} parent=15 // pred_check
          %p488 = pneg %p111
        $region26: #{tpu_custom_call.1} parent=15 // pred_check_branch
          %490 = sbr.rel (%p488) target = $region28
        $region27: #{tpu_custom_call.1} parent=15 // pred_region
          %p491 = scmp.lt.s32.totalorder %s34, 1
          %s492 = scalar_select %p491, %s34, 1
          %s493 = scalar_lea.vmem %s2, %s492
        $region28: #{tpu_custom_call.1} parent=15 // pred_fallthru
          _
        // Predicated region
        $region29: #{tpu_custom_call.1} parent=15 // pred_check
          %p494 = pneg %p137
        $region30: #{tpu_custom_call.1} parent=15 // pred_check_branch
          %496 = sbr.rel (%p494) target = $region32
        $region31: #{tpu_custom_call.1} parent=15 // pred_region
          %p497 = scmp.lt.s32.totalorder %s35, 1
          %s498 = scalar_select %p497, %s35, 1
          %s499 = smul.addr %s498, 4
          %s500 = smul.addr %s499, 4
          %s501 = scalar_lea.vmem %s3, %s500
        $region32: #{tpu_custom_call.1} parent=15 // pred_fallthru
          _
        // Predicated region
        $region33: #{tpu_custom_call.1} parent=15 // pred_check
          %p502 = pneg %p163
        $region34: #{tpu_custom_call.1} parent=15 // pred_check_branch
          %504 = sbr.rel (%p502) target = $region36
        $region35: #{tpu_custom_call.1} parent=15 // pred_region
          %p505 = scmp.lt.s32.totalorder %s35, 1
          %s506 = scalar_select %p505, %s35, 1
          %s507 = scalar_lea.vmem %s4, %s506
        $region36: #{tpu_custom_call.1} parent=15 // pred_fallthru
          _
        // Predicated region
        $region37: #{tpu_custom_call.1} parent=15 // pred_check
          %p508 = pneg %p189
        $region38: #{tpu_custom_call.1} parent=15 // pred_check_branch
          %510 = sbr.rel (%p508) target = $region40
        $region39: #{tpu_custom_call.1} parent=15 // pred_region
          %p511 = scmp.lt.s32.totalorder %s35, 1
          %s512 = scalar_select %p511, %s35, 1
          %s513 = smul.addr %s512, 4
          %s514 = smul.addr %s513, 4
          %s515 = scalar_lea.vmem %s5, %s514
        $region40: #{tpu_custom_call.1} parent=15 // pred_fallthru
          _
        // Predicated region
        $region41: #{tpu_custom_call.1} parent=15 // pred_check
          %p516 = pneg %p215
        $region42: #{tpu_custom_call.1} parent=15 // pred_check_branch
          %518 = sbr.rel (%p516) target = $region44
        $region43: #{tpu_custom_call.1} parent=15 // pred_region
          %p519 = scmp.lt.s32.totalorder %s35, 1
          %s520 = scalar_select %p519, %s35, 1
          %s521 = scalar_lea.vmem %s6, %s520
        $region44: #{tpu_custom_call.1} parent=15 // pred_fallthru
          _
        // Predicated region
        $region45: #{tpu_custom_call.1} parent=15 // pred_check
          %p522 = pneg %p241
        $region46: #{tpu_custom_call.1} parent=15 // pred_check_branch
          %524 = sbr.rel (%p522) target = $region48
        $region47: #{tpu_custom_call.1} parent=15 // pred_region
          %p525 = scmp.lt.s32.totalorder %s35, 1
          %s526 = scalar_select %p525, %s35, 1
          %s527 = scalar_lea.vmem %s7, %s526
        $region48: #{tpu_custom_call.1} parent=15 // pred_fallthru
          _
        // Predicated region
        $region49: #{tpu_custom_call.1} parent=15 // pred_check
          %p528 = pneg %p267
        $region50: #{tpu_custom_call.1} parent=15 // pred_check_branch
          %530 = sbr.rel (%p528) target = $region52
        $region51: #{tpu_custom_call.1} parent=15 // pred_region
          %p531 = scmp.lt.s32.totalorder %s35, 1
          %s532 = scalar_select %p531, %s35, 1
          %s533 = scalar_lea.vmem %s8, %s532
        $region52: #{tpu_custom_call.1} parent=15 // pred_fallthru
          _
        // Predicated region
        $region53: #{tpu_custom_call.1} parent=15 // pred_check
          %p534 = pneg %p293
        $region54: #{tpu_custom_call.1} parent=15 // pred_check_branch
          %536 = sbr.rel (%p534) target = $region56
        $region55: #{tpu_custom_call.1} parent=15 // pred_region
          %p537 = scmp.lt.s32.totalorder %s35, 1
          %s538 = scalar_select %p537, %s35, 1
          %s539 = smul.addr %s538, 4
          %s540 = smul.addr %s539, 4
          %s541 = scalar_lea.vmem %s9, %s540
        $region56: #{tpu_custom_call.1} parent=15 // pred_fallthru
          _
        // Predicated region
        $region57: #{tpu_custom_call.1} parent=15 // pred_check
          %p542 = pneg %p319
        $region58: #{tpu_custom_call.1} parent=15 // pred_check_branch
          %544 = sbr.rel (%p542) target = $region60
        $region59: #{tpu_custom_call.1} parent=15 // pred_region
          %s545 = sand.u32 %s309, 1
          %s546 = scalar_lea.sflag [#allocation4], %s545
          %s547 = sand.u32 %s309, 1
          %s548 = scalar_lea.vmem [#allocation3], %s547
          %s550 = ssub.s32 16, 16
          %551 = vsyncadd %s546, %s550
          %s552 = smul.addr %s35, 16
          %s553 = scalar_lea.hbm %s10, %s552
          %s555 = sshll.u32 %s548, 4
          %s556 = int_to_ptr.vmem [resolvable:$true] %s555
          %558 = dma.hbm_to_vmem [thread:$0]  %s553, 16, %s556, %s546
        $region60: #{tpu_custom_call.1} parent=15 // pred_fallthru
          _
        // Predicated region
        $region61: #{tpu_custom_call.1} parent=15 // pred_check
          %p559 = pneg %p345
        $region62: #{tpu_custom_call.1} parent=15 // pred_check_branch
          %561 = sbr.rel (%p559) target = $region64
        $region63: #{tpu_custom_call.1} parent=15 // pred_region
          %p562 = scmp.lt.s32.totalorder %s35, 1
          %s563 = scalar_select %p562, %s35, 1
          %s564 = smul.addr %s563, 8
          %s565 = smul.addr %s564, 4
          %s566 = scalar_lea.vmem %s11, %s565
        $region64: #{tpu_custom_call.1} parent=15 // pred_fallthru
          _
        // Predicated region
        $region65: #{tpu_custom_call.1} parent=15 // pred_check
          %p567 = pneg %p371
        $region66: #{tpu_custom_call.1} parent=15 // pred_check_branch
          %569 = sbr.rel (%p567) target = $region68
        $region67: #{tpu_custom_call.1} parent=15 // pred_region
          %p570 = scmp.lt.s32.totalorder %s35, 1
          %s571 = scalar_select %p570, %s35, 1
          %s572 = scalar_lea.vmem %s12, %s571
        $region68: #{tpu_custom_call.1} parent=15 // pred_fallthru
          _
        // Predicated region
        $region69: #{tpu_custom_call.1} parent=15 // pred_check
          %p573 = pneg %p397
        $region70: #{tpu_custom_call.1} parent=15 // pred_check_branch
          %575 = sbr.rel (%p573) target = $region72
        $region71: #{tpu_custom_call.1} parent=15 // pred_region
          %p576 = scmp.lt.s32.totalorder %s35, 1
          %s577 = scalar_select %p576, %s35, 1
          %s578 = scalar_lea.vmem %s13, %s577
        $region72: #{tpu_custom_call.1} parent=15 // pred_fallthru
          _
        // Predicated region
        $region73: #{tpu_custom_call.1} parent=15 // pred_check
          %p579 = pneg %p423
        $region74: #{tpu_custom_call.1} parent=15 // pred_check_branch
          %581 = sbr.rel (%p579) target = $region76
        $region75: #{tpu_custom_call.1} parent=15 // pred_region
          %p582 = scmp.lt.s32.totalorder %s35, 1
          %s583 = scalar_select %p582, %s35, 1
          %s584 = scalar_lea.vmem %s14, %s583
        $region76: #{tpu_custom_call.1} parent=15 // pred_fallthru
          _
      $region16: #{tpu_custom_call.1} parent=5 // pred_fallthru
        _
      %p585 = scmp.le.s32.totalorder 1, %s27
      %p586 = scmp.lt.s32.totalorder %s27, 5
      %p587 = pnand %p585, %p586
      %p588 = pneg %p587
      // Predicated region
      $region77: #{tpu_custom_call.1} parent=5 // pred_check
        _
      $region78: #{tpu_custom_call.1} parent=5 // pred_check_branch
        %590 = sbr.rel (%p587) target = $region80
      $region79: #{tpu_custom_call.1} parent=5 // pred_region
        %s591 = ssub.s32 %s27, 1
        %s592 = sand.u32 %s312, 1
        %s593 = scalar_lea.sflag [#allocation4], %s592
        %s594 = sand.u32 %s312, 1
        %s595 = scalar_lea.vmem [#allocation3], %s594
        // Predicated region
        $region81: #{tpu_custom_call.1} parent=79 // pred_check
          %p596 = pneg %p325
        $region82: #{tpu_custom_call.1} parent=79 // pred_check_branch
          %598 = sbr.rel (%p596) target = $region84
        $region83: #{tpu_custom_call.1} parent=79 // pred_region
          %599 = dma.done %s593, 16
        $region84: #{tpu_custom_call.1} parent=79 // pred_fallthru
          _
        %p600 = scmp.lt.s32.totalorder %s36, 1
        %s601 = scalar_select %p600, %s36, 1
        %s602 = smul.addr %s601, 8
        %s603 = scalar_lea.vmem %s0, %s602
        %p604 = pneg %p65
        %p605 = pneg %p62
        %p606 = scmp.lt.s32.totalorder %s36, 1
        %s607 = scalar_select %p606, %s36, 1
        %s608 = smul.addr %s607, 8
        %s609 = scalar_lea.vmem %s1, %s608
        %p610 = pneg %p91
        %p611 = pneg %p88
        %p612 = scmp.lt.s32.totalorder %s36, 1
        %s613 = scalar_select %p612, %s36, 1
        %s614 = scalar_lea.vmem %s2, %s613
        %p615 = pneg %p117
        %p616 = pneg %p114
        %p617 = scmp.lt.s32.totalorder %s37, 1
        %s618 = scalar_select %p617, %s37, 1
        %s619 = smul.addr %s618, 4
        %s620 = smul.addr %s619, 4
        %s621 = scalar_lea.vmem %s3, %s620
        %p622 = pneg %p143
        %p623 = pneg %p140
        %p624 = scmp.lt.s32.totalorder %s37, 1
        %s625 = scalar_select %p624, %s37, 1
        %s626 = scalar_lea.vmem %s4, %s625
        %p627 = pneg %p169
        %p628 = pneg %p166
        %p629 = scmp.lt.s32.totalorder %s37, 1
        %s630 = scalar_select %p629, %s37, 1
        %s631 = smul.addr %s630, 4
        %s632 = smul.addr %s631, 4
        %s633 = scalar_lea.vmem %s5, %s632
        %p634 = pneg %p195
        %p635 = pneg %p192
        %p636 = scmp.lt.s32.totalorder %s37, 1
        %s637 = scalar_select %p636, %s37, 1
        %s638 = scalar_lea.vmem %s6, %s637
        %p639 = pneg %p221
        %p640 = pneg %p218
        %p641 = scmp.lt.s32.totalorder %s37, 1
        %s642 = scalar_select %p641, %s37, 1
        %s643 = scalar_lea.vmem %s7, %s642
        %p644 = pneg %p247
        %p645 = pneg %p244
        %p646 = scmp.lt.s32.totalorder %s37, 1
        %s647 = scalar_select %p646, %s37, 1
        %s648 = scalar_lea.vmem %s8, %s647
        %p649 = pneg %p273
        %p650 = pneg %p270
        %p651 = scmp.lt.s32.totalorder %s37, 1
        %s652 = scalar_select %p651, %s37, 1
        %s653 = smul.addr %s652, 4
        %s654 = smul.addr %s653, 4
        %s655 = scalar_lea.vmem %s9, %s654
        %p656 = pneg %p299
        %p657 = pneg %p296
        %s658 = sand.u32 %s312, 1
        %s659 = scalar_lea.sflag [#allocation4], %s658
        %s660 = sand.u32 %s312, 1
        %s661 = scalar_lea.vmem [#allocation3], %s660
        %p662 = pneg %p325
        %p663 = pneg %p322
        %p664 = scmp.lt.s32.totalorder %s37, 1
        %s665 = scalar_select %p664, %s37, 1
        %s666 = smul.addr %s665, 8
        %s667 = smul.addr %s666, 4
        %s668 = scalar_lea.vmem %s11, %s667
        %p669 = pneg %p351
        %p670 = pneg %p348
        %p671 = scmp.lt.s32.totalorder %s37, 1
        %s672 = scalar_select %p671, %s37, 1
        %s673 = scalar_lea.vmem %s12, %s672
        %p674 = pneg %p377
        %p675 = pneg %p374
        %p676 = scmp.lt.s32.totalorder %s37, 1
        %s677 = scalar_select %p676, %s37, 1
        %s678 = scalar_lea.vmem %s13, %s677
        %p679 = pneg %p403
        %p680 = pneg %p400
        %p681 = scmp.lt.s32.totalorder %s37, 1
        %s682 = scalar_select %p681, %s37, 1
        %s683 = scalar_lea.vmem %s14, %s682
        %p684 = pneg %p429
        %p685 = pneg %p426
        %p686 = pneg %p455
        %p687 = pneg %p452
        %s688 = sand.u32 %s442, 1
        %s689 = scalar_lea.sflag [#allocation5], %s688
        %s690 = sand.u32 %s442, 1
        %s691 = scalar_lea.vmem [#allocation6], %s690
        %p692 = scmp.lt.s32.totalorder %s36, 1
        %s693 = scalar_select %p692, %s36, 1
        %s694 = smul.addr %s693, 8
        %s695 = scalar_lea.vmem %s0, %s694
        %p696 = scmp.lt.s32.totalorder %s36, 1
        %s697 = scalar_select %p696, %s36, 1
        %s698 = smul.addr %s697, 8
        %s699 = scalar_lea.vmem %s1, %s698
        %p700 = scmp.lt.s32.totalorder %s36, 1
        %s701 = scalar_select %p700, %s36, 1
        %s702 = scalar_lea.vmem %s2, %s701
        %p703 = scmp.lt.s32.totalorder %s37, 1
        %s704 = scalar_select %p703, %s37, 1
        %s705 = smul.addr %s704, 4
        %s706 = smul.addr %s705, 4
        %s707 = scalar_lea.vmem %s3, %s706
        %p708 = scmp.lt.s32.totalorder %s37, 1
        %s709 = scalar_select %p708, %s37, 1
        %s710 = scalar_lea.vmem %s4, %s709
        %p711 = scmp.lt.s32.totalorder %s37, 1
        %s712 = scalar_select %p711, %s37, 1
        %s713 = smul.addr %s712, 4
        %s714 = smul.addr %s713, 4
        %s715 = scalar_lea.vmem %s5, %s714
        %p716 = scmp.lt.s32.totalorder %s37, 1
        %s717 = scalar_select %p716, %s37, 1
        %s718 = scalar_lea.vmem %s6, %s717
        %p719 = scmp.lt.s32.totalorder %s37, 1
        %s720 = scalar_select %p719, %s37, 1
        %s721 = scalar_lea.vmem %s7, %s720
        %p722 = scmp.lt.s32.totalorder %s37, 1
        %s723 = scalar_select %p722, %s37, 1
        %s724 = scalar_lea.vmem %s8, %s723
        %p725 = scmp.lt.s32.totalorder %s37, 1
        %s726 = scalar_select %p725, %s37, 1
        %s727 = smul.addr %s726, 4
        %s728 = smul.addr %s727, 4
        %s729 = scalar_lea.vmem %s9, %s728
        %p730 = scmp.lt.s32.totalorder %s37, 1
        %s731 = scalar_select %p730, %s37, 1
        %s732 = smul.addr %s731, 8
        %s733 = smul.addr %s732, 4
        %s734 = scalar_lea.vmem %s11, %s733
        %p735 = scmp.lt.s32.totalorder %s37, 1
        %s736 = scalar_select %p735, %s37, 1
        %s737 = scalar_lea.vmem %s12, %s736
        %p738 = scmp.lt.s32.totalorder %s37, 1
        %s739 = scalar_select %p738, %s37, 1
        %s740 = scalar_lea.vmem %s13, %s739
        %p741 = scmp.lt.s32.totalorder %s37, 1
        %s742 = scalar_select %p741, %s37, 1
        %s743 = scalar_lea.vmem %s14, %s742
        %p745 = scmp.eq.s32.totalorder %s37, 0
        // Predicated region
        $region85: #{tpu_custom_call.1} parent=79 // pred_check
          %p746 = pneg %p745
        $region86: #{tpu_custom_call.1} parent=79 // pred_check_branch
          %748 = sbr.rel (%p746) target = $region88
        $region87: #{tpu_custom_call.1} parent=79 // pred_region
          %v749 = vld [vmem:[%s695] sm:$0xff]
          %vm750 = vcmask 261120
          %751 = vst.msk [vmem:[#allocation2] sm:$0xff] %vm750, %v749
        $region88: #{tpu_custom_call.1} parent=79 // pred_fallthru
          _
        %v752 = vld [vmem:[#allocation2] sm:$0xff]
        %v753 = vld [vmem:[%s699] sm:$0xff]
        %v754 = vld [vmem:[%s702] sm:$0x1]
        %v755 = vpack.c.bf16 %v752, %v752
        %v756 = vld [vmem:[%s707] sm:$0xf]
        %v757 = vld [vmem:[%s707 + $0x4] sm:$0xf]
        %v758 = vld [vmem:[%s707 + $0x8] sm:$0xf]
        %v759 = vld [vmem:[%s707 + $0xc] sm:$0xf]
        %v760 = vld [vmem:[%s710] sm:$0x1]
        %v762 = vlaneseq
        %v763 = vshrl.u32 %v762, 7
        %v764 = vsub.s32 0, %v763
        %v765 = vrot.slane %v760, %v764
        %v771 = vunpack.c.l.b16 %v756
        %v772 = vunpack.c.l.b16 %v757
        %v773 = vunpack.c.l.b16 %v758
        %v774 = vunpack.c.l.b16 %v759
        %v775 = vpack.c.b16 %v772, %v771
        %v776 = vpack.c.b16 %v774, %v773
        %vm779 = vcmask 261120
        %v781 = vsel %vm779, %v755, 0
        %783 = vmatprep.subr.bf16.mxu0 0
        %784 = vmatpush1.bf16.msra.mxu0 %v775
        %785 = vmatprep.subr.bf16.mxu0 0
        %786 = vmatpush1.bf16.msra.mxu0 %v776
        %787 = vmatprep.subr.bf16.mxu0 0
        %788 = vmatpush1.bf16.msra.mxu0 0
        %789 = vmatprep.subr.bf16.mxu0 0
        %790 = vmatpush1.bf16.msra.mxu0 0
        %791 = vmatprep.subr.bf16.mxu0 0
        %792 = vmatpush1.bf16.msra.mxu0 0
        %793 = vmatprep.subr.bf16.mxu0 0
        %794 = vmatpush1.bf16.msra.mxu0 0
        %795 = vmatprep.subr.bf16.mxu0 0
        %796 = vmatpush1.bf16.msra.mxu0 0
        %797 = vmatprep.subr.bf16.mxu0 0
        %798 = vmatpush1.bf16.msra.mxu0 0
        %799 = vmatprep.subr.bf16.mxu0 0
        %800 = vmatpush1.bf16.msra.mxu0 0
        %801 = vmatprep.subr.bf16.mxu0 0
        %802 = vmatpush1.bf16.msra.mxu0 0
        %803 = vmatprep.subr.bf16.mxu0 0
        %804 = vmatpush1.bf16.msra.mxu0 0
        %805 = vmatprep.subr.bf16.mxu0 0
        %806 = vmatpush1.bf16.msra.mxu0 0
        %807 = vmatprep.subr.bf16.mxu0 0
        %808 = vmatpush1.bf16.msra.mxu0 0
        %809 = vmatprep.subr.bf16.mxu0 0
        %810 = vmatpush1.bf16.msra.mxu0 0
        %811 = vmatprep.subr.bf16.mxu0 0
        %812 = vmatpush1.bf16.msra.mxu0 0
        %813 = vmatprep.subr.bf16.mxu0 0
        %814 = vmatpush1.bf16.msra.mxu0 0
        %815 = vmatprep.mubr.bf16.mxu0 0
        %816 = vmatmul.mubr.bf16.gmra.mrb[0].mxu0 %v781
        %v817 = vpop.f32.mrb[0].mxu0
        %v818 = vadd.f32 %v765, %v817
        %v819 = vpop.f32.mrb[0].mxu0
        %v820 = vpop.f32.mrb[0].mxu0
        %v821 = vpop.f32.mrb[0].mxu0
        %822 = vdwg.mxu0
        %824 = vrot.lane.b32.xlu0 %v818, 112
        %v825 = vpop.permute.xlu0 %824
        %v827 = vpack.c.bf16 %v818, %v818
        %v828 = vpack.c.bf16 %v825, %v825
        %v830 = vlaneseq
        %v831 = vshrl.u32 %v830, 7
        %v832 = vsub.s32 0, %v831
        %v833 = vrot.slane %v754, %v832
        %836 = vrot.lane.b32.xlu0 %v827, 96
        %v837 = vpop.permute.xlu0 %836
        %vm838 = vcmask 130048
        %v840 = vsel %vm838, %v827, 0
        %v843 = vsel %vm838, %v837, 0
        %845 = vmatprep.subr.bf16.mxu0 0
        %846 = vmatpush1.bf16.xpose.msra.mxu0 %v843
        %847 = vmatprep.subr.bf16.mxu0 0
        %848 = vmatpush1.bf16.xpose.msra.mxu0 0
        %849 = vmatprep.subr.bf16.mxu0 0
        %850 = vmatpush1.bf16.xpose.msra.mxu0 0
        %851 = vmatprep.subr.bf16.mxu0 0
        %852 = vmatpush1.bf16.xpose.msra.mxu0 0
        %853 = vmatprep.subr.bf16.mxu0 0
        %854 = vmatpush1.bf16.xpose.msra.mxu0 0
        %855 = vmatprep.subr.bf16.mxu0 0
        %856 = vmatpush1.bf16.xpose.msra.mxu0 0
        %857 = vmatprep.subr.bf16.mxu0 0
        %858 = vmatpush1.bf16.xpose.msra.mxu0 0
        %859 = vmatprep.subr.bf16.mxu0 0
        %860 = vmatpush1.bf16.xpose.msra.mxu0 0
        %861 = vmatprep.subr.bf16.mxu0 0
        %862 = vmatpush1.bf16.xpose.msra.mxu0 0
        %863 = vmatprep.subr.bf16.mxu0 0
        %864 = vmatpush1.bf16.xpose.msra.mxu0 0
        %865 = vmatprep.subr.bf16.mxu0 0
        %866 = vmatpush1.bf16.xpose.msra.mxu0 0
        %867 = vmatprep.subr.bf16.mxu0 0
        %868 = vmatpush1.bf16.xpose.msra.mxu0 0
        %869 = vmatprep.subr.bf16.mxu0 0
        %870 = vmatpush1.bf16.xpose.msra.mxu0 0
        %871 = vmatprep.subr.bf16.mxu0 0
        %872 = vmatpush1.bf16.xpose.msra.mxu0 0
        %873 = vmatprep.subr.bf16.mxu0 0
        %874 = vmatpush1.bf16.xpose.msra.mxu0 0
        %875 = vmatprep.subr.bf16.mxu0 0
        %876 = vmatpush1.bf16.xpose.msra.mxu0 0
        %877 = vmatprep.mubr.bf16.mxu0 0
        %878 = vmatmul.mubr.bf16.gmra.mrb[0].mxu0 %v840
        %v879 = vpop.f32.mrb[0].mxu0
        %v880 = vadd.f32 %v833, %v879
        %v881 = vpop.f32.mrb[0].mxu0
        %v882 = vpop.f32.mrb[0].mxu0
        %v883 = vpop.f32.mrb[0].mxu0
        %884 = vdwg.mxu0
        %886 = vrot.lane.b32.xlu0 %v828, 96
        %v887 = vpop.permute.xlu0 %886
        %v889 = vsel %vm838, %v828, 0
        %v892 = vsel %vm838, %v887, 0
        %894 = vmatprep.subr.bf16.mxu0 0
        %895 = vmatpush1.bf16.xpose.msra.mxu0 %v892
        %896 = vmatprep.subr.bf16.mxu0 0
        %897 = vmatpush1.bf16.xpose.msra.mxu0 0
        %898 = vmatprep.subr.bf16.mxu0 0
        %899 = vmatpush1.bf16.xpose.msra.mxu0 0
        %900 = vmatprep.subr.bf16.mxu0 0
        %901 = vmatpush1.bf16.xpose.msra.mxu0 0
        %902 = vmatprep.subr.bf16.mxu0 0
        %903 = vmatpush1.bf16.xpose.msra.mxu0 0
        %904 = vmatprep.subr.bf16.mxu0 0
        %905 = vmatpush1.bf16.xpose.msra.mxu0 0
        %906 = vmatprep.subr.bf16.mxu0 0
        %907 = vmatpush1.bf16.xpose.msra.mxu0 0
        %908 = vmatprep.subr.bf16.mxu0 0
        %909 = vmatpush1.bf16.xpose.msra.mxu0 0
        %910 = vmatprep.subr.bf16.mxu0 0
        %911 = vmatpush1.bf16.xpose.msra.mxu0 0
        %912 = vmatprep.subr.bf16.mxu0 0
        %913 = vmatpush1.bf16.xpose.msra.mxu0 0
        %914 = vmatprep.subr.bf16.mxu0 0
        %915 = vmatpush1.bf16.xpose.msra.mxu0 0
        %916 = vmatprep.subr.bf16.mxu0 0
        %917 = vmatpush1.bf16.xpose.msra.mxu0 0
        %918 = vmatprep.subr.bf16.mxu0 0
        %919 = vmatpush1.bf16.xpose.msra.mxu0 0
        %920 = vmatprep.subr.bf16.mxu0 0
        %921 = vmatpush1.bf16.xpose.msra.mxu0 0
        %922 = vmatprep.subr.bf16.mxu0 0
        %923 = vmatpush1.bf16.xpose.msra.mxu0 0
        %924 = vmatprep.subr.bf16.mxu0 0
        %925 = vmatpush1.bf16.xpose.msra.mxu0 0
        %926 = vmatprep.mubr.bf16.mxu0 0
        %927 = vmatmul.mubr.bf16.gmra.mrb[0].mxu0 %v889
        %v928 = vpop.f32.mrb[0].mxu0
        %v929 = vadd.f32 %v833, %v928
        %v930 = vpop.f32.mrb[0].mxu0
        %v931 = vpop.f32.mrb[0].mxu0
        %v932 = vpop.f32.mrb[0].mxu0
        %933 = vdwg.mxu0
        %vm934 = vcmask 64512
        %v935 = vsel %vm934, %v880, -inf
        %936 = vmax.xlane.f32.xlu0 %v935
        %v937 = vpop.xlane.xlu0 %936
        %v938 = vsel %vm934, %v929, -inf
        %939 = vmax.xlane.f32.xlu0 %v938
        %v940 = vpop.xlane.xlu0 %939
        %v941 = vsub.f32 %v880, %v937
        %v942 = vsub.f32 %v929, %v940
        %v943 = vmul.f32 %v941, 1.442695
        %v944 = vpow.pop %v943
        %v945 = vmul.f32 %v942, 1.442695
        %v946 = vpow.pop %v945
        %v947 = vsel %vm934, %v944, 0.0
        %948 = vadd.xlane.f32.xlu0 %v947
        %v949 = vpop.xlane.xlu0 %948
        %v950 = vsel %vm934, %v946, 0.0
        %951 = vadd.xlane.f32.xlu0 %v950
        %v952 = vpop.xlane.xlu0 %951
        %v953 = vrcp.pop %v949
        %v954 = vrcp.pop %v952
        %v955 = vmul.f32 %v944, %v953
        %v956 = vmul.f32 %v946, %v954
        %v957 = vpack.c.bf16 %v955, %v955
        %v958 = vpack.c.bf16 %v956, %v956
        %959 = vrot.lane.b32.xlu0 %v827, 64
        %v960 = vpop.permute.xlu0 %959
        %v962 = vsel %vm934, %v957, 0
        %vm964 = vcmask 1043456
        %v966 = vsel %vm964, %v960, 0
        %968 = vmatprep.subr.bf16.mxu0 0
        %969 = vmatpush1.bf16.msra.mxu0 %v966
        %970 = vmatprep.subr.bf16.mxu0 0
        %971 = vmatpush1.bf16.msra.mxu0 0
        %972 = vmatprep.subr.bf16.mxu0 0
        %973 = vmatpush1.bf16.msra.mxu0 0
        %974 = vmatprep.subr.bf16.mxu0 0
        %975 = vmatpush1.bf16.msra.mxu0 0
        %976 = vmatprep.subr.bf16.mxu0 0
        %977 = vmatpush1.bf16.msra.mxu0 0
        %978 = vmatprep.subr.bf16.mxu0 0
        %979 = vmatpush1.bf16.msra.mxu0 0
        %980 = vmatprep.subr.bf16.mxu0 0
        %981 = vmatpush1.bf16.msra.mxu0 0
        %982 = vmatprep.subr.bf16.mxu0 0
        %983 = vmatpush1.bf16.msra.mxu0 0
        %984 = vmatprep.subr.bf16.mxu0 0
        %985 = vmatpush1.bf16.msra.mxu0 0
        %986 = vmatprep.subr.bf16.mxu0 0
        %987 = vmatpush1.bf16.msra.mxu0 0
        %988 = vmatprep.subr.bf16.mxu0 0
        %989 = vmatpush1.bf16.msra.mxu0 0
        %990 = vmatprep.subr.bf16.mxu0 0
        %991 = vmatpush1.bf16.msra.mxu0 0
        %992 = vmatprep.subr.bf16.mxu0 0
        %993 = vmatpush1.bf16.msra.mxu0 0
        %994 = vmatprep.subr.bf16.mxu0 0
        %995 = vmatpush1.bf16.msra.mxu0 0
        %996 = vmatprep.subr.bf16.mxu0 0
        %997 = vmatpush1.bf16.msra.mxu0 0
        %998 = vmatprep.subr.bf16.mxu0 0
        %999 = vmatpush1.bf16.msra.mxu0 0
        %1000 = vmatprep.mubr.bf16.mxu0 0
        %1001 = vmatmul.mubr.bf16.gmra.mrb[0].mxu0 %v962
        %v1002 = vpop.f32.mrb[0].mxu0
        %v1003 = vadd.f32 0.0, %v1002
        %v1004 = vpop.f32.mrb[0].mxu0
        %v1005 = vpop.f32.mrb[0].mxu0
        %v1006 = vpop.f32.mrb[0].mxu0
        %1007 = vdwg.mxu0
        %1008 = vrot.lane.b32.xlu0 %v828, 64
        %v1009 = vpop.permute.xlu0 %1008
        %v1011 = vsel %vm934, %v958, 0
        %v1014 = vsel %vm964, %v1009, 0
        %1016 = vmatprep.subr.bf16.mxu0 0
        %1017 = vmatpush1.bf16.msra.mxu0 %v1014
        %1018 = vmatprep.subr.bf16.mxu0 0
        %1019 = vmatpush1.bf16.msra.mxu0 0
        %1020 = vmatprep.subr.bf16.mxu0 0
        %1021 = vmatpush1.bf16.msra.mxu0 0
        %1022 = vmatprep.subr.bf16.mxu0 0
        %1023 = vmatpush1.bf16.msra.mxu0 0
        %1024 = vmatprep.subr.bf16.mxu0 0
        %1025 = vmatpush1.bf16.msra.mxu0 0
        %1026 = vmatprep.subr.bf16.mxu0 0
        %1027 = vmatpush1.bf16.msra.mxu0 0
        %1028 = vmatprep.subr.bf16.mxu0 0
        %1029 = vmatpush1.bf16.msra.mxu0 0
        %1030 = vmatprep.subr.bf16.mxu0 0
        %1031 = vmatpush1.bf16.msra.mxu0 0
        %1032 = vmatprep.subr.bf16.mxu0 0
        %1033 = vmatpush1.bf16.msra.mxu0 0
        %1034 = vmatprep.subr.bf16.mxu0 0
        %1035 = vmatpush1.bf16.msra.mxu0 0
        %1036 = vmatprep.subr.bf16.mxu0 0
        %1037 = vmatpush1.bf16.msra.mxu0 0
        %1038 = vmatprep.subr.bf16.mxu0 0
        %1039 = vmatpush1.bf16.msra.mxu0 0
        %1040 = vmatprep.subr.bf16.mxu0 0
        %1041 = vmatpush1.bf16.msra.mxu0 0
        %1042 = vmatprep.subr.bf16.mxu0 0
        %1043 = vmatpush1.bf16.msra.mxu0 0
        %1044 = vmatprep.subr.bf16.mxu0 0
        %1045 = vmatpush1.bf16.msra.mxu0 0
        %1046 = vmatprep.subr.bf16.mxu0 0
        %1047 = vmatpush1.bf16.msra.mxu0 0
        %1048 = vmatprep.mubr.bf16.mxu0 0
        %1049 = vmatmul.mubr.bf16.gmra.mrb[0].mxu0 %v1011
        %v1050 = vpop.f32.mrb[0].mxu0
        %v1051 = vadd.f32 0.0, %v1050
        %v1052 = vpop.f32.mrb[0].mxu0
        %v1053 = vpop.f32.mrb[0].mxu0
        %v1054 = vpop.f32.mrb[0].mxu0
        %1055 = vdwg.mxu0
        %1057 = vrot.lane.b32.xlu0 %v1051, 16
        %v1058 = vpop.permute.xlu0 %1057
        %v1060 = vsel %vm838, %v1003, %v1058
        %v1061 = vpack.c.bf16 %v1060, %v1060
        %v1062 = vld [vmem:[%s715] sm:$0xf]
        %v1063 = vld [vmem:[%s715 + $0x4] sm:$0xf]
        %v1064 = vld [vmem:[%s715 + $0x8] sm:$0xf]
        %v1065 = vld [vmem:[%s715 + $0xc] sm:$0xf]
        %v1066 = vld [vmem:[%s718] sm:$0x1]
        %v1068 = vlaneseq
        %v1069 = vshrl.u32 %v1068, 7
        %v1070 = vsub.s32 0, %v1069
        %v1071 = vrot.slane %v1066, %v1070
        %v1077 = vunpack.c.l.b16 %v1062
        %v1078 = vunpack.c.l.b16 %v1063
        %v1079 = vunpack.c.l.b16 %v1064
        %v1080 = vunpack.c.l.b16 %v1065
        %v1081 = vpack.c.b16 %v1078, %v1077
        %v1082 = vpack.c.b16 %v1080, %v1079
        %v1086 = vsel %vm779, %v1061, 0
        %1088 = vmatprep.subr.bf16.mxu0 0
        %1089 = vmatpush1.bf16.msra.mxu0 %v1081
        %1090 = vmatprep.subr.bf16.mxu0 0
        %1091 = vmatpush1.bf16.msra.mxu0 %v1082
        %1092 = vmatprep.subr.bf16.mxu0 0
        %1093 = vmatpush1.bf16.msra.mxu0 0
        %1094 = vmatprep.subr.bf16.mxu0 0
        %1095 = vmatpush1.bf16.msra.mxu0 0
        %1096 = vmatprep.subr.bf16.mxu0 0
        %1097 = vmatpush1.bf16.msra.mxu0 0
        %1098 = vmatprep.subr.bf16.mxu0 0
        %1099 = vmatpush1.bf16.msra.mxu0 0
        %1100 = vmatprep.subr.bf16.mxu0 0
        %1101 = vmatpush1.bf16.msra.mxu0 0
        %1102 = vmatprep.subr.bf16.mxu0 0
        %1103 = vmatpush1.bf16.msra.mxu0 0
        %1104 = vmatprep.subr.bf16.mxu0 0
        %1105 = vmatpush1.bf16.msra.mxu0 0
        %1106 = vmatprep.subr.bf16.mxu0 0
        %1107 = vmatpush1.bf16.msra.mxu0 0
        %1108 = vmatprep.subr.bf16.mxu0 0
        %1109 = vmatpush1.bf16.msra.mxu0 0
        %1110 = vmatprep.subr.bf16.mxu0 0
        %1111 = vmatpush1.bf16.msra.mxu0 0
        %1112 = vmatprep.subr.bf16.mxu0 0
        %1113 = vmatpush1.bf16.msra.mxu0 0
        %1114 = vmatprep.subr.bf16.mxu0 0
        %1115 = vmatpush1.bf16.msra.mxu0 0
        %1116 = vmatprep.subr.bf16.mxu0 0
        %1117 = vmatpush1.bf16.msra.mxu0 0
        %1118 = vmatprep.subr.bf16.mxu0 0
        %1119 = vmatpush1.bf16.msra.mxu0 0
        %1120 = vmatprep.mubr.bf16.mxu0 0
        %1121 = vmatmul.mubr.bf16.gmra.mrb[0].mxu0 %v1086
        %v1122 = vpop.f32.mrb[0].mxu0
        %v1123 = vadd.f32 %v1071, %v1122
        %v1124 = vpop.f32.mrb[0].mxu0
        %v1125 = vpop.f32.mrb[0].mxu0
        %v1126 = vpop.f32.mrb[0].mxu0
        %1127 = vdwg.mxu0
        %v1128 = vadd.f32 %v752, %v1123
        %v1129 = vld [vmem:[%s721] sm:$0x1]
        %v1130 = vld [vmem:[%s724] sm:$0x1]
        %v1131 = vsel %vm779, %v1128, 0.0
        %1132 = vadd.xlane.f32.xlu0 %v1131
        %v1133 = vpop.xlane.xlu0 %1132
        %v1134 = vrcp.pop 32.0
        %v1135 = vmul.f32 %v1133, %v1134
        %v1136 = vsub.f32 %v1128, %v1135
        %v1137 = vmul.f32 %v1136, %v1136
        %v1138 = vsel %vm779, %v1137, 0.0
        %1139 = vadd.xlane.f32.xlu0 %v1138
        %v1140 = vpop.xlane.xlu0 %1139
        %v1141 = vmul.f32 %v1140, %v1134
        %v1142 = vadd.f32 %v1141, 1e-05
        %v1143 = vrsqrt.pop %v1142
        %v1144 = vmul.f32 %v1136, %v1143
        %v1146 = vlaneseq
        %v1147 = vshrl.u32 %v1146, 7
        %v1148 = vsub.s32 0, %v1147
        %v1149 = vrot.slane %v1129, %v1148
        %v1151 = vmul.f32 %v1144, %v1149
        %v1153 = vlaneseq
        %v1154 = vshrl.u32 %v1153, 7
        %v1155 = vsub.s32 0, %v1154
        %v1156 = vrot.slane %v1130, %v1155
        %v1158 = vadd.f32 %v1151, %v1156
        %v1159 = vpack.c.bf16 %v1158, %v1158
        %v1160 = vld [vmem:[%s729] sm:$0xf]
        %v1161 = vld [vmem:[%s729 + $0x4] sm:$0xf]
        %v1162 = vld [vmem:[%s729 + $0x8] sm:$0xf]
        %v1163 = vld [vmem:[%s729 + $0xc] sm:$0xf]
        %v1164 = vld [vmem:[%s595] sm:$0x1]
        %v1166 = vlaneseq
        %v1167 = vshrl.u32 %v1166, 7
        %v1168 = vsub.s32 0, %v1167
        %v1169 = vrot.slane %v1164, %v1168
        %v1175 = vunpack.c.l.b16 %v1160
        %v1176 = vunpack.c.l.b16 %v1161
        %v1177 = vunpack.c.l.b16 %v1162
        %v1178 = vunpack.c.l.b16 %v1163
        %v1179 = vpack.c.b16 %v1176, %v1175
        %v1180 = vpack.c.b16 %v1178, %v1177
        %v1184 = vsel %vm779, %v1159, 0
        %1186 = vmatprep.subr.bf16.mxu0 0
        %1187 = vmatpush1.bf16.msra.mxu0 %v1179
        %1188 = vmatprep.subr.bf16.mxu0 0
        %1189 = vmatpush1.bf16.msra.mxu0 %v1180
        %1190 = vmatprep.subr.bf16.mxu0 0
        %1191 = vmatpush1.bf16.msra.mxu0 0
        %1192 = vmatprep.subr.bf16.mxu0 0
        %1193 = vmatpush1.bf16.msra.mxu0 0
        %1194 = vmatprep.subr.bf16.mxu0 0
        %1195 = vmatpush1.bf16.msra.mxu0 0
        %1196 = vmatprep.subr.bf16.mxu0 0
        %1197 = vmatpush1.bf16.msra.mxu0 0
        %1198 = vmatprep.subr.bf16.mxu0 0
        %1199 = vmatpush1.bf16.msra.mxu0 0
        %1200 = vmatprep.subr.bf16.mxu0 0
        %1201 = vmatpush1.bf16.msra.mxu0 0
        %1202 = vmatprep.subr.bf16.mxu0 0
        %1203 = vmatpush1.bf16.msra.mxu0 0
        %1204 = vmatprep.subr.bf16.mxu0 0
        %1205 = vmatpush1.bf16.msra.mxu0 0
        %1206 = vmatprep.subr.bf16.mxu0 0
        %1207 = vmatpush1.bf16.msra.mxu0 0
        %1208 = vmatprep.subr.bf16.mxu0 0
        %1209 = vmatpush1.bf16.msra.mxu0 0
        %1210 = vmatprep.subr.bf16.mxu0 0
        %1211 = vmatpush1.bf16.msra.mxu0 0
        %1212 = vmatprep.subr.bf16.mxu0 0
        %1213 = vmatpush1.bf16.msra.mxu0 0
        %1214 = vmatprep.subr.bf16.mxu0 0
        %1215 = vmatpush1.bf16.msra.mxu0 0
        %1216 = vmatprep.subr.bf16.mxu0 0
        %1217 = vmatpush1.bf16.msra.mxu0 0
        %1218 = vmatprep.mubr.bf16.mxu0 0
        %1219 = vmatmul.mubr.bf16.gmra.mrb[0].mxu0 %v1184
        %v1220 = vpop.f32.mrb[0].mxu0
        %v1221 = vadd.f32 %v1169, %v1220
        %v1222 = vpop.f32.mrb[0].mxu0
        %v1223 = vpop.f32.mrb[0].mxu0
        %v1224 = vpop.f32.mrb[0].mxu0
        %1225 = vdwg.mxu0
        %v1226 = vmax.f32 %v1221, 0.0
        %v1227 = vpack.c.bf16 %v1226, %v1226
        %v1228 = vld [vmem:[%s734] sm:$0xf]
        %v1229 = vld [vmem:[%s734 + $0x4] sm:$0xf]
        %v1230 = vld [vmem:[%s734 + $0x8] sm:$0xf]
        %v1231 = vld [vmem:[%s734 + $0xc] sm:$0xf]
        %v1232 = vld [vmem:[%s734 + $0x10] sm:$0xf]
        %v1233 = vld [vmem:[%s734 + $0x14] sm:$0xf]
        %v1234 = vld [vmem:[%s734 + $0x18] sm:$0xf]
        %v1235 = vld [vmem:[%s734 + $0x1c] sm:$0xf]
        %v1236 = vld [vmem:[%s737] sm:$0x1]
        %v1238 = vlaneseq
        %v1239 = vshrl.u32 %v1238, 7
        %v1240 = vsub.s32 0, %v1239
        %v1241 = vrot.slane %v1236, %v1240
        %v1251 = vunpack.c.l.b16 %v1228
        %v1252 = vunpack.c.l.b16 %v1229
        %v1253 = vunpack.c.l.b16 %v1230
        %v1254 = vunpack.c.l.b16 %v1231
        %v1255 = vunpack.c.l.b16 %v1232
        %v1256 = vunpack.c.l.b16 %v1233
        %v1257 = vunpack.c.l.b16 %v1234
        %v1258 = vunpack.c.l.b16 %v1235
        %v1259 = vpack.c.b16 %v1252, %v1251
        %v1260 = vpack.c.b16 %v1254, %v1253
        %v1261 = vpack.c.b16 %v1256, %v1255
        %v1262 = vpack.c.b16 %v1258, %v1257
        %vm1267 = vcmask 523264
        %v1269 = vsel %vm1267, %v1227, 0
        %1271 = vmatprep.subr.bf16.mxu0 0
        %1272 = vmatpush1.bf16.msra.mxu0 %v1259
        %1273 = vmatprep.subr.bf16.mxu0 0
        %1274 = vmatpush1.bf16.msra.mxu0 %v1260
        %1275 = vmatprep.subr.bf16.mxu0 0
        %1276 = vmatpush1.bf16.msra.mxu0 %v1261
        %1277 = vmatprep.subr.bf16.mxu0 0
        %1278 = vmatpush1.bf16.msra.mxu0 %v1262
        %1279 = vmatprep.subr.bf16.mxu0 0
        %1280 = vmatpush1.bf16.msra.mxu0 0
        %1281 = vmatprep.subr.bf16.mxu0 0
        %1282 = vmatpush1.bf16.msra.mxu0 0
        %1283 = vmatprep.subr.bf16.mxu0 0
        %1284 = vmatpush1.bf16.msra.mxu0 0
        %1285 = vmatprep.subr.bf16.mxu0 0
        %1286 = vmatpush1.bf16.msra.mxu0 0
        %1287 = vmatprep.subr.bf16.mxu0 0
        %1288 = vmatpush1.bf16.msra.mxu0 0
        %1289 = vmatprep.subr.bf16.mxu0 0
        %1290 = vmatpush1.bf16.msra.mxu0 0
        %1291 = vmatprep.subr.bf16.mxu0 0
        %1292 = vmatpush1.bf16.msra.mxu0 0
        %1293 = vmatprep.subr.bf16.mxu0 0
        %1294 = vmatpush1.bf16.msra.mxu0 0
        %1295 = vmatprep.subr.bf16.mxu0 0
        %1296 = vmatpush1.bf16.msra.mxu0 0
        %1297 = vmatprep.subr.bf16.mxu0 0
        %1298 = vmatpush1.bf16.msra.mxu0 0
        %1299 = vmatprep.subr.bf16.mxu0 0
        %1300 = vmatpush1.bf16.msra.mxu0 0
        %1301 = vmatprep.subr.bf16.mxu0 0
        %1302 = vmatpush1.bf16.msra.mxu0 0
        %1303 = vmatprep.mubr.bf16.mxu0 0
        %1304 = vmatmul.mubr.bf16.gmra.mrb[0].mxu0 %v1269
        %v1305 = vpop.f32.mrb[0].mxu0
        %v1306 = vadd.f32 %v1241, %v1305
        %v1307 = vpop.f32.mrb[0].mxu0
        %v1308 = vpop.f32.mrb[0].mxu0
        %v1309 = vpop.f32.mrb[0].mxu0
        %1310 = vdwg.mxu0
        %v1311 = vadd.f32 %v1158, %v1306
        %v1312 = vld [vmem:[%s740] sm:$0x1]
        %v1313 = vld [vmem:[%s743] sm:$0x1]
        %v1314 = vsel %vm779, %v1311, 0.0
        %1315 = vadd.xlane.f32.xlu0 %v1314
        %v1316 = vpop.xlane.xlu0 %1315
        %v1317 = vmul.f32 %v1316, %v1134
        %v1318 = vsub.f32 %v1311, %v1317
        %v1319 = vmul.f32 %v1318, %v1318
        %v1320 = vsel %vm779, %v1319, 0.0
        %1321 = vadd.xlane.f32.xlu0 %v1320
        %v1322 = vpop.xlane.xlu0 %1321
        %v1323 = vmul.f32 %v1322, %v1134
        %v1324 = vadd.f32 %v1323, 1e-05
        %v1325 = vrsqrt.pop %v1324
        %v1326 = vmul.f32 %v1318, %v1325
        %v1328 = vlaneseq
        %v1329 = vshrl.u32 %v1328, 7
        %v1330 = vsub.s32 0, %v1329
        %v1331 = vrot.slane %v1312, %v1330
        %v1333 = vmul.f32 %v1326, %v1331
        %v1335 = vlaneseq
        %v1336 = vshrl.u32 %v1335, 7
        %v1337 = vsub.s32 0, %v1336
        %v1338 = vrot.slane %v1313, %v1337
        %v1340 = vadd.f32 %v1333, %v1338
        %1342 = vset.pattern.permute.xlu0 0
        %1343 = vperm.xlu0 %1342, %v753
        %v1344 = vpop.permute.xlu0 %1343
        %v1346 = vmul.f32 %v1340, %v1344
        %1347 = vst.msk [vmem:[#allocation2] sm:$0xff] %vm779, %v1346
        %p1348 = scmp.eq.s32.totalorder %s37, 1
        // Predicated region
        $region89: #{tpu_custom_call.1} parent=79 // pred_check
          %p1349 = pneg %p1348
        $region90: #{tpu_custom_call.1} parent=79 // pred_check_branch
          %1351 = sbr.rel (%p1349) target = $region92
        $region91: #{tpu_custom_call.1} parent=79 // pred_region
          %vm1352 = vcmask 7168
          %v1353 = vsel %vm1352, %v753, 0.0
          %v1354 = vrot.slane %v1353, 4
          %v1355 = vadd.f32 %v1353, %v1354
          %v1356 = vrot.slane %v1355, 2
          %v1357 = vadd.f32 %v1355, %v1356
          %v1358 = vrot.slane %v1357, 1
          %v1359 = vadd.f32 %v1357, %v1358
          %v1360 = vmax.f32 %v1359, 1e-07
          %v1361 = vsel %vm779, %v1346, 0.0
          %v1362 = vrot.slane %v1361, 4
          %v1363 = vadd.f32 %v1361, %v1362
          %v1364 = vrot.slane %v1363, 2
          %v1365 = vadd.f32 %v1363, %v1364
          %v1366 = vrot.slane %v1365, 1
          %v1367 = vadd.f32 %v1365, %v1366
          %1369 = vset.pattern.permute.xlu0 0
          %1370 = vperm.xlu0 %1369, %v1360
          %v1371 = vpop.permute.xlu0 %1370
          %v1373 = vrcp.pop %v1371
          %v1374 = vmul.f32 %v1367, %v1373
          %vm1375 = vcmask 253952
          %1376 = vst.msk [vmem:[%s691] sm:$0x1] %vm1375, %v1374
        $region92: #{tpu_custom_call.1} parent=79 // pred_fallthru
          _
        %s1377 = sand.u32 %s442, 1
        %s1378 = scalar_lea.sflag [#allocation5], %s1377
        %s1379 = sand.u32 %s442, 1
        %s1380 = scalar_lea.vmem [#allocation6], %s1379
        // Predicated region
        $region93: #{tpu_custom_call.1} parent=79 // pred_check
          %p1381 = pneg %p452
        $region94: #{tpu_custom_call.1} parent=79 // pred_check_branch
          %1383 = sbr.rel (%p1381) target = $region96
        $region95: #{tpu_custom_call.1} parent=79 // pred_region
          %s1385 = ssub.s32 16, 16
          %1386 = vsyncadd %s1378, %s1385
          %s1387 = smul.addr %s36, 16
          %s1388 = scalar_lea.hbm %s15, %s1387
          %s1390 = sshll.u32 %s1380, 4
          %s1391 = int_to_ptr.vmem [resolvable:$true] %s1390
          %1393 = dma.vmem_to_hbm [thread:$0]  %s1391, 16, %s1388, %s1378
        $region96: #{tpu_custom_call.1} parent=79 // pred_fallthru
          _
      $region80: #{tpu_custom_call.1} parent=5 // pred_fallthru
        _
      %p1394 = scmp.le.s32.totalorder 2, %s27
      // Predicated region
      $region97: #{tpu_custom_call.1} parent=5 // pred_check
        %p1395 = pneg %p1394
      $region98: #{tpu_custom_call.1} parent=5 // pred_check_branch
        %1397 = sbr.rel (%p1395) target = $region100
      $region99: #{tpu_custom_call.1} parent=5 // pred_region
        %s1398 = ssub.s32 %s27, 2
        // Predicated region
        $region101: #{tpu_custom_call.1} parent=99 // pred_check
          %p1399 = pneg %p458
        $region102: #{tpu_custom_call.1} parent=99 // pred_check_branch
          %1401 = sbr.rel (%p1399) target = $region104
        $region103: #{tpu_custom_call.1} parent=99 // pred_region
          %s1402 = sand.u32 %s443, 1
          %s1403 = scalar_lea.sflag [#allocation5], %s1402
          %s1404 = sand.u32 %s443, 1
          %s1405 = scalar_lea.vmem [#allocation6], %s1404
          %1406 = dma.done %s1403, 16
        $region104: #{tpu_custom_call.1} parent=99 // pred_fallthru
          _
      $region100: #{tpu_custom_call.1} parent=5 // pred_fallthru
        _
    $region6: #{tpu_custom_call.1} parent=1 // loop_footer
      %s31 = sadd.s32 1, %s27
    $region7: #{tpu_custom_call.1} parent=1 // loop_footer_branch
      %26 = sbr.rel target = $region3
    $region8: #{tpu_custom_call.1} parent=1 // loop_exit
      _
    %1407 = vsyncpa [#allocation4], 1
    %s1408 = scalar_lea.sflag [#allocation4], 1
    %1409 = vsyncpa %s1408, 1
    %1410 = vsyncpa [#allocation5], 1
    %s1411 = scalar_lea.sflag [#allocation5], 1
    %1412 = vsyncpa %s1411, 1

</llo_original>
